<compile_context>
chip_gen: v5e
topology: v5e:2x2
jax: 0.10.0
libtpu: 0.0.40
codegen_flags: <defaults>
</compile_context>

<pallas_src>
import functools
import math

import jax
import jax.numpy as jnp
from jax.experimental import pallas as pl
from jax.experimental.pallas import tpu as pltpu

_LANE = 128
_NEG_INF = -1e30  # logit bias for padded (fake) classes


# ----------------------------------------------------------------------------
# In-kernel math helpers (pure jnp on values; all math in f32)
# ----------------------------------------------------------------------------
def _layernorm(x, gamma, beta, eps=1e-5):
    # var = E[x^2] - mean^2: two independent reductions over the same x
    # (more ILP, removes the full-tile subtract+square before the 2nd reduce).
    mean = jnp.mean(x, axis=-1, keepdims=True)
    mean_sq = jnp.mean(jnp.square(x), axis=-1, keepdims=True)
    var = jnp.maximum(mean_sq - jnp.square(mean), 0.0)
    return (x - mean) * jax.lax.rsqrt(var + eps) * gamma + beta


def _log_softmax(x):
    m = jnp.max(x, axis=-1, keepdims=True)
    s = x - m
    return s - jnp.log(jnp.sum(jnp.exp(s), axis=-1, keepdims=True))


def _classifier_tail(h, w_k1, b_k1, g_k, be_k, w_k2, b_k2, matmul_dtype):
    # classifier: Linear -> LayerNorm -> ReLU -> (Dropout: identity) -> Linear -> LogSoftmax
    z = jnp.dot(h.astype(matmul_dtype), w_k1,
                preferred_element_type=jnp.float32) + b_k1
    z = jnp.maximum(_layernorm(z, g_k, be_k), 0.0)
    logits = jnp.dot(z.astype(matmul_dtype), w_k2,
                     preferred_element_type=jnp.float32) + b_k2
    return _log_softmax(logits)


# ----------------------------------------------------------------------------
# Kernels
# ----------------------------------------------------------------------------
def _dual_branch_kernel(
    x_ref,
    w_ts_ref, b_ts_ref, g_t1_ref, be_t1_ref, w_t2_ref, b_t2_ref,
    g_s1_ref, be_s1_ref,
    wc_t_ref, wc_s_ref, b_c_ref, g_c_ref, be_c_ref,
    w_k1_ref, b_k1_ref, g_k_ref, be_k_ref, w_k2_ref, b_k2_ref,
    o_ref, *, matmul_dtype, hidden_size,
):
    H, H4 = hidden_size, hidden_size // 4
    x = x_ref[...].astype(matmul_dtype)

    # Fused first layer for BOTH branches (single MXU pass over the x tile):
    #   u[:, :H]      = x_tfidf @ W_t1 + b_t1   (tfidf branch pre-activation)
    #   u[:, H:H+H/4] = x_stats @ W_s1 + b_s1   (stats branch pre-activation)
    # The feature split is folded into zero rows of the packed weight.
    u = jnp.dot(x, w_ts_ref[...], preferred_element_type=jnp.float32) + b_ts_ref[...]

    # TF-IDF branch: LayerNorm -> ReLU -> (Dropout) -> Linear
    t = jnp.maximum(_layernorm(u[:, :H], g_t1_ref[...], be_t1_ref[...]), 0.0)
    t = jnp.dot(t.astype(matmul_dtype), w_t2_ref[...],
                preferred_element_type=jnp.float32) + b_t2_ref[...]

    # Stats branch: LayerNorm -> ReLU -> (Dropout)
    s = jnp.maximum(_layernorm(u[:, H:H + H4], g_s1_ref[...], be_s1_ref[...]), 0.0)

    # Combine layer: concat([t, s]) @ Wc  ==  t @ Wc[:H/2] + s @ Wc[H/2:]
    c = (jnp.dot(t.astype(matmul_dtype), wc_t_ref[...],
                 preferred_element_type=jnp.float32)
         + jnp.dot(s.astype(matmul_dtype), wc_s_ref[...],
                   preferred_element_type=jnp.float32)
         + b_c_ref[...])
    c = jnp.maximum(_layernorm(c, g_c_ref[...], be_c_ref[...]), 0.0)

    o_ref[...] = _classifier_tail(
        c, w_k1_ref[...], b_k1_ref[...], g_k_ref[...], be_k_ref[...],
        w_k2_ref[...], b_k2_ref[...], matmul_dtype).astype(o_ref.dtype)


def _simple_path_kernel(
    x_ref,
    w_i1_ref, b_i1_ref, g_i1_ref, be_i1_ref,
    w_i2_ref, b_i2_ref, g_i2_ref, be_i2_ref,
    w_k1_ref, b_k1_ref, g_k_ref, be_k_ref, w_k2_ref, b_k2_ref,
    o_ref, *, matmul_dtype,
):
    x = x_ref[...].astype(matmul_dtype)

    # input_layer: Linear -> LN -> ReLU -> (Dropout) -> Linear -> LN -> ReLU -> (Dropout)
    h = jnp.dot(x, w_i1_ref[...], preferred_element_type=jnp.float32) + b_i1_ref[...]
    h = jnp.maximum(_layernorm(h, g_i1_ref[...], be_i1_ref[...]), 0.0)
    h = jnp.dot(h.astype(matmul_dtype), w_i2_ref[...],
                preferred_element_type=jnp.float32) + b_i2_ref[...]
    h = jnp.maximum(_layernorm(h, g_i2_ref[...], be_i2_ref[...]), 0.0)

    o_ref[...] = _classifier_tail(
        h, w_k1_ref[...], b_k1_ref[...], g_k_ref[...], be_k_ref[...],
        w_k2_ref[...], b_k2_ref[...], matmul_dtype).astype(o_ref.dtype)


# ----------------------------------------------------------------------------
# Wrapper: batch-tiled pallas_call with VMEM-resident parameters
# ----------------------------------------------------------------------------
def _round_up(x, m):
    return ((x + m - 1) // m) * m


def _tiled_forward(kernel_fn, x, params, n_classes, tile_b=None, **kernel_kwargs):
    B, F = x.shape
    matmul_dtype = params[0].dtype           # weights pre-cast in prepare_*
    c_pad = params[-1].shape[-1]             # lane-padded class width (>= 128)

    # Sublane minimum depends on the streamed x dtype (8 for f32, 16 sub-32-bit).
    sub = 8 if x.dtype.itemsize >= 4 else 16
    if tile_b is None:
        # 128 keeps >=2 grid steps per v7x core at realistic batch sizes and
        # collapses to a single step (grid=1, no pointless pipelining) at small B.
        tile_b = 128
    tb = _round_up(min(tile_b, _round_up(B, sub)), sub)
    Bp = _round_up(B, tb)
    if Bp != B:
        # Zero-pad the batch so every tile is full; padded rows are sliced off below.
        x = jnp.pad(x, ((0, Bp - B), (0, 0)))
    grid = (Bp // tb,)

    x_spec = pl.BlockSpec((tb, F), lambda i: (i, 0))
    # Constant index_map: weights stay VMEM-resident across batch tiles.
    param_specs = [
        pl.BlockSpec(p.shape, lambda i, nd=p.ndim: (0,) * nd) for p in params
    ]
    out_spec = pl.BlockSpec((tb, c_pad), lambda i: (i, 0))

    # VMEM budget: double-buffered x/out tiles + resident params + headroom,
    # capped below physical VMEM (leave compiler scratch headroom on v7x).
    param_bytes = sum(math.prod(p.shape) * p.dtype.itemsize for p in params)
    tile_bytes = 2 * tb * (F * x.dtype.itemsize + c_pad * 4)
    try:
        phys_vmem = getattr(pltpu.get_tpu_info(), "vmem_capacity_bytes", 64 << 20)
    except Exception:  # pragma: no cover - hardware query fallback
        phys_vmem = 64 << 20
    vmem_limit = int(min(max(4 * (tile_bytes + param_bytes) + (8 << 20), 16 << 20),
                         (phys_vmem * 3) // 4))

    out = pl.pallas_call(
        functools.partial(kernel_fn, matmul_dtype=matmul_dtype, **kernel_kwargs),
        grid=grid,
        in_specs=[x_spec] + param_specs,
        out_specs=out_spec,
        out_shape=jax.ShapeDtypeStruct((Bp, c_pad), jnp.float32),
        compiler_params=pltpu.CompilerParams(
            dimension_semantics=("parallel",),   # megacore sharding on v7x
            vmem_limit_bytes=vmem_limit,
        ),
    )(x, *params)
    return out[:B, :n_classes]


def enhanced_forward_dual(x, params, n_classes=4, hidden_size=64, tile_b=None):
    return _tiled_forward(_dual_branch_kernel, x, params, n_classes, tile_b,
                          hidden_size=hidden_size)


def enhanced_forward_simple(x, params, n_classes=4, tile_b=None):
    return _tiled_forward(_simple_path_kernel, x, params, n_classes, tile_b)


# ----------------------------------------------------------------------------
# One-time parameter preparation (outside the per-call path):
#  - transpose every Linear weight to [in, out] and pre-cast to the MXU dtype
#  - fold the tfidf/stats feature split into one packed, lane-padded
#    first-layer weight (single fused dot for both branches)
#  - split the combine weight by rows to replace the concat
#  - pad the classifier output to 128 lanes (zero cols, -1e30 fake-class bias)
#  - biases / LayerNorm params stay f32, reshaped to [1, D]
# ----------------------------------------------------------------------------
def prepare_dual_branch_params(raw, input_size, tfidf_dim, stats_dim, hidden_size,
                               n_classes, matmul_dtype=jnp.bfloat16):
    H, H2, H4 = hidden_size, hidden_size // 2, hidden_size // 4
    f32 = jnp.float32
    row = lambda v: jnp.asarray(v, f32).reshape(1, -1)
    wt = lambda w: jnp.asarray(w, f32).T.astype(matmul_dtype)

    # Fused first layer: columns [:H] are the tfidf branch, [H:H+H4] the stats
    # branch; rows outside each branch's feature range are zero.
    n_ts = _round_up(H + H4, _LANE)
    w_ts = jnp.zeros((input_size, n_ts), f32)
    w_ts = w_ts.at[:tfidf_dim, :H].set(jnp.asarray(raw["t_lin1_w"], f32).T)
    w_ts = w_ts.at[tfidf_dim:tfidf_dim + stats_dim, H:H + H4].set(
        jnp.asarray(raw["s_lin_w"], f32).T)
    w_ts = w_ts.astype(matmul_dtype)
    b_ts = jnp.zeros((1, n_ts), f32)
    b_ts = b_ts.at[0, :H].set(jnp.asarray(raw["t_lin1_b"], f32))
    b_ts = b_ts.at[0, H:H + H4].set(jnp.asarray(raw["s_lin_b"], f32))

    wc = jnp.asarray(raw["c_lin_w"], f32).T            # [H/2 + H/4, H/2]
    wc_t, wc_s = wc[:H2].astype(matmul_dtype), wc[H2:].astype(matmul_dtype)

    # Lane-dense classifier head: pad classes to 128.
    c_pad = max(_LANE, _round_up(n_classes, _LANE))
    w_k2 = jnp.zeros((H4, c_pad), f32).at[:, :n_classes].set(
        jnp.asarray(raw["k_lin2_w"], f32).T).astype(matmul_dtype)
    b_k2 = jnp.full((1, c_pad), _NEG_INF, f32).at[0, :n_classes].set(
        jnp.asarray(raw["k_lin2_b"], f32))

    return (
        w_ts, b_ts, row(raw["t_ln_g"]), row(raw["t_ln_b"]),
        wt(raw["t_lin2_w"]), row(raw["t_lin2_b"]),
        row(raw["s_ln_g"]), row(raw["s_ln_b"]),
        wc_t, wc_s, row(raw["c_lin_b"]), row(raw["c_ln_g"]), row(raw["c_ln_b"]),
        wt(raw["k_lin1_w"]), row(raw["k_lin1_b"]), row(raw["k_ln_g"]), row(raw["k_ln_b"]),
        w_k2, b_k2,
    )


def prepare_simple_path_params(raw, n_classes, matmul_dtype=jnp.bfloat16):
    f32 = jnp.float32
    row = lambda v: jnp.asarray(v, f32).reshape(1, -1)
    wt = lambda w: jnp.asarray(w, f32).T.astype(matmul_dtype)

    H4 = raw["k_lin1_w"].shape[0]
    c_pad = max(_LANE, _round_up(n_classes, _LANE))
    w_k2 = jnp.zeros((H4, c_pad), f32).at[:, :n_classes].set(
        jnp.asarray(raw["k_lin2_w"], f32).T).astype(matmul_dtype)
    b_k2 = jnp.full((1, c_pad), _NEG_INF, f32).at[0, :n_classes].set(
        jnp.asarray(raw["k_lin2_b"], f32))

    return (
        wt(raw["i_lin1_w"]), row(raw["i_lin1_b"]), row(raw["i_ln1_g"]), row(raw["i_ln1_b"]),
        wt(raw["i_lin2_w"]), row(raw["i_lin2_b"]), row(raw["i_ln2_g"]), row(raw["i_ln2_b"]),
        wt(raw["k_lin1_w"]), row(raw["k_lin1_b"]), row(raw["k_ln_g"]), row(raw["k_ln_b"]),
        w_k2, b_k2,
    )


# ----------------------------------------------------------------------------
# Pure-JAX references (PyTorch-convention params). matmul_dtype mirrors the
# kernel's cast-at-the-dot points so bf16 runs can be checked tightly.
# ----------------------------------------------------------------------------
def _mm(a, w, matmul_dtype):
    return jnp.dot(a.astype(matmul_dtype), w.T.astype(matmul_dtype),
                   preferred_element_type=jnp.float32)


def _dual_reference(x, p, tfidf_dim, matmul_dtype=jnp.float32):
    mm = lambda a, w: _mm(a, w, matmul_dtype)
    xt, xs = x[:, :tfidf_dim], x[:, tfidf_dim:]
    tb_ = jnp.maximum(_layernorm(mm(xt, p["t_lin1_w"]) + p["t_lin1_b"],
                                 p["t_ln_g"], p["t_ln_b"]), 0.0)
    tb_ = mm(tb_, p["t_lin2_w"]) + p["t_lin2_b"]
    sb = jnp.maximum(_layernorm(mm(xs, p["s_lin_w"]) + p["s_lin_b"],
                                p["s_ln_g"], p["s_ln_b"]), 0.0)
    comb = jnp.concatenate([tb_, sb], axis=1)
    c = jnp.maximum(_layernorm(mm(comb, p["c_lin_w"]) + p["c_lin_b"],
                               p["c_ln_g"], p["c_ln_b"]), 0.0)
    z = jnp.maximum(_layernorm(mm(c, p["k_lin1_w"]) + p["k_lin1_b"],
                               p["k_ln_g"], p["k_ln_b"]), 0.0)
    logits = mm(z, p["k_lin2_w"]) + p["k_lin2_b"]
    return jax.nn.log_softmax(logits, axis=1)


def _simple_reference(x, p, matmul_dtype=jnp.float32):
    mm = lambda a, w: _mm(a, w, matmul_dtype)
    h = jnp.maximum(_layernorm(mm(x, p["i_lin1_w"]) + p["i_lin1_b"],
                               p["i_ln1_g"], p["i_ln1_b"]), 0.0)
    h = jnp.maximum(_layernorm(mm(h, p["i_lin2_w"]) + p["i_lin2_b"],
                               p["i_ln2_g"], p["i_ln2_b"]), 0.0)
    z = jnp.maximum(_layernorm(mm(h, p["k_lin1_w"]) + p["k_lin1_b"],
                               p["k_ln_g"], p["k_ln_b"]), 0.0)
    logits = mm(z, p["k_lin2_w"]) + p["k_lin2_b"]
    return jax.nn.log_softmax(logits, axis=1)


def _make_dual_raw_params(key, tfidf_dim, stats_dim, hidden, n_classes):
    H, H2, H4 = hidden, hidden // 2, hidden // 4
    ks = iter(jax.random.split(key, 24))
    w = lambda shape, s=0.1: s * jax.random.normal(next(ks), shape, dtype=jnp.float32)
    return {
        "t_lin1_w": w((H, tfidf_dim)), "t_lin1_b": w((H,)),
        "t_ln_g": 1.0 + w((H,), 0.05), "t_ln_b": w((H,), 0.05),
        "t_lin2_w": w((H2, H)), "t_lin2_b": w((H2,)),
        "s_lin_w": w((H4, stats_dim)), "s_lin_b": w((H4,)),
        "s_ln_g": 1.0 + w((H4,), 0.05), "s_ln_b": w((H4,), 0.05),
        "c_lin_w": w((H2, H2 + H4)), "c_lin_b": w((H2,)),
        "c_ln_g": 1.0 + w((H2,), 0.05), "c_ln_b": w((H2,), 0.05),
        "k_lin1_w": w((H4, H2)), "k_lin1_b": w((H4,)),
        "k_ln_g": 1.0 + w((H4,), 0.05), "k_ln_b": w((H4,), 0.05),
        "k_lin2_w": w((n_classes, H4)), "k_lin2_b": w((n_classes,)),
    }


def _make_simple_raw_params(key, input_size, hidden, n_classes):
    H, H2, H4 = hidden, hidden // 2, hidden // 4
    ks = iter(jax.random.split(key, 16))
    w = lambda shape, s=0.1: s * jax.random.normal(next(ks), shape, dtype=jnp.float32)
    return {
        "i_lin1_w": w((H, input_size)), "i_lin1_b": w((H,)),
        "i_ln1_g": 1.0 + w((H,), 0.05), "i_ln1_b": w((H,), 0.05),
        "i_lin2_w": w((H2, H)), "i_lin2_b": w((H2,)),
        "i_ln2_g": 1.0 + w((H2,), 0.05), "i_ln2_b": w((H2,), 0.05),
        "k_lin1_w": w((H4, H2)), "k_lin1_b": w((H4,)),
        "k_ln_g": 1.0 + w((H4,), 0.05), "k_ln_b": w((H4,), 0.05),
        "k_lin2_w": w((n_classes, H4)), "k_lin2_b": w((n_classes,)),
    }


if __name__ == "__main__":
    # Small shapes consistent with the module: hidden_size=64, n_classes=4,
    # input features split 48 (tfidf) + 16 (stats) = 64 for the dual branch.
    B = 64
    input_size = 64
    hidden = 64
    n_classes = 4
    tfidf_dim, stats_dim = 48, 16

    key = jax.random.PRNGKey(0)
    kx, kd, ks = jax.random.split(key, 3)
    x = jax.random.normal(kx, (B, input_size), dtype=jnp.float32)

    raw_dual = _make_dual_raw_params(kd, tfidf_dim, stats_dim, hidden, n_classes)
    raw_simple = _make_simple_raw_params(ks, input_size, hidden, n_classes)

    # bf16 is the default (perf) config; also check the exact-f32 config.
    for name, md, tol in (("bf16", jnp.bfloat16, 2e-3), ("f32", jnp.float32, 1e-4)):
        # ---- dual-branch configuration (tfidf_dim & stats_dim provided) ----
        dual_params = prepare_dual_branch_params(
            raw_dual, input_size, tfidf_dim, stats_dim, hidden, n_classes,
            matmul_dtype=md)
        out_dual = jax.block_until_ready(
            enhanced_forward_dual(x, dual_params, n_classes=n_classes,
                                  hidden_size=hidden))
        ref_dual = _dual_reference(x, raw_dual, tfidf_dim, matmul_dtype=md)
        assert out_dual.shape == (B, n_classes)
        assert jnp.allclose(out_dual, ref_dual, atol=tol, rtol=tol), (
            f"dual-branch ({name}) mismatch: "
            f"max|diff|={jnp.max(jnp.abs(out_dual - ref_dual))}")

        # ---- simple configuration (tfidf_dim / stats_dim are None) ----
        simple_params = prepare_simple_path_params(raw_simple, n_classes,
                                                   matmul_dtype=md)
        out_simple = jax.block_until_ready(
            enhanced_forward_simple(x, simple_params, n_classes=n_classes))
        ref_simple = _simple_reference(x, raw_simple, matmul_dtype=md)
        assert out_simple.shape == (B, n_classes)
        assert jnp.allclose(out_simple, ref_simple, atol=tol, rtol=tol), (
            f"simple-path ({name}) mismatch: "
            f"max|diff|={jnp.max(jnp.abs(out_simple - ref_simple))}")

    print("KERNEL_OK")
</pallas_src>

<mosaic_0001>
module attributes {stable_mosaic.version = 11 : i64} {
  func.func @_dual_branch_kernel(%arg0: i32, %arg1: memref<64x64xf32, #tpu.memory_space<vmem>>, %arg2: memref<64x128xbf16, #tpu.memory_space<vmem>>, %arg3: memref<1x128xf32, #tpu.memory_space<vmem>>, %arg4: memref<1x64xf32, #tpu.memory_space<vmem>>, %arg5: memref<1x64xf32, #tpu.memory_space<vmem>>, %arg6: memref<64x32xbf16, #tpu.memory_space<vmem>>, %arg7: memref<1x32xf32, #tpu.memory_space<vmem>>, %arg8: memref<1x16xf32, #tpu.memory_space<vmem>>, %arg9: memref<1x16xf32, #tpu.memory_space<vmem>>, %arg10: memref<32x32xbf16, #tpu.memory_space<vmem>>, %arg11: memref<16x32xbf16, #tpu.memory_space<vmem>>, %arg12: memref<1x32xf32, #tpu.memory_space<vmem>>, %arg13: memref<1x32xf32, #tpu.memory_space<vmem>>, %arg14: memref<1x32xf32, #tpu.memory_space<vmem>>, %arg15: memref<32x16xbf16, #tpu.memory_space<vmem>>, %arg16: memref<1x16xf32, #tpu.memory_space<vmem>>, %arg17: memref<1x16xf32, #tpu.memory_space<vmem>>, %arg18: memref<1x16xf32, #tpu.memory_space<vmem>>, %arg19: memref<16x128xbf16, #tpu.memory_space<vmem>>, %arg20: memref<1x128xf32, #tpu.memory_space<vmem>>, %arg21: memref<64x128xf32, #tpu.memory_space<vmem>>) attributes {dimension_semantics = [#tpu.dimension_semantics<parallel>], iteration_bounds = array<i64: 1>, scalar_prefetch = 0 : i64, scratch_operands = 0 : i64, tpu.core_type = #tpu.core_type<tc>, window_params = [{transform_indices = @transform_0, window_bounds = array<i64: 64, 64>}, {pipeline_mode = #tpu.pipeline_mode<synchronous>, transform_indices = @transform_1, window_bounds = array<i64: 64, 128>}, {pipeline_mode = #tpu.pipeline_mode<synchronous>, transform_indices = @transform_2, window_bounds = array<i64: 1, 128>}, {pipeline_mode = #tpu.pipeline_mode<synchronous>, transform_indices = @transform_3, window_bounds = array<i64: 1, 64>}, {pipeline_mode = #tpu.pipeline_mode<synchronous>, transform_indices = @transform_4, window_bounds = array<i64: 1, 64>}, {pipeline_mode = #tpu.pipeline_mode<synchronous>, transform_indices = @transform_5, window_bounds = array<i64: 64, 32>}, {pipeline_mode = #tpu.pipeline_mode<synchronous>, transform_indices = @transform_6, window_bounds = array<i64: 1, 32>}, {pipeline_mode = #tpu.pipeline_mode<synchronous>, transform_indices = @transform_7, window_bounds = array<i64: 1, 16>}, {pipeline_mode = #tpu.pipeline_mode<synchronous>, transform_indices = @transform_8, window_bounds = array<i64: 1, 16>}, {pipeline_mode = #tpu.pipeline_mode<synchronous>, transform_indices = @transform_9, window_bounds = array<i64: 32, 32>}, {pipeline_mode = #tpu.pipeline_mode<synchronous>, transform_indices = @transform_10, window_bounds = array<i64: 16, 32>}, {pipeline_mode = #tpu.pipeline_mode<synchronous>, transform_indices = @transform_11, window_bounds = array<i64: 1, 32>}, {pipeline_mode = #tpu.pipeline_mode<synchronous>, transform_indices = @transform_12, window_bounds = array<i64: 1, 32>}, {pipeline_mode = #tpu.pipeline_mode<synchronous>, transform_indices = @transform_13, window_bounds = array<i64: 1, 32>}, {pipeline_mode = #tpu.pipeline_mode<synchronous>, transform_indices = @transform_14, window_bounds = array<i64: 32, 16>}, {pipeline_mode = #tpu.pipeline_mode<synchronous>, transform_indices = @transform_15, window_bounds = array<i64: 1, 16>}, {pipeline_mode = #tpu.pipeline_mode<synchronous>, transform_indices = @transform_16, window_bounds = array<i64: 1, 16>}, {pipeline_mode = #tpu.pipeline_mode<synchronous>, transform_indices = @transform_17, window_bounds = array<i64: 1, 16>}, {pipeline_mode = #tpu.pipeline_mode<synchronous>, transform_indices = @transform_18, window_bounds = array<i64: 16, 128>}, {pipeline_mode = #tpu.pipeline_mode<synchronous>, transform_indices = @transform_19, window_bounds = array<i64: 1, 128>}, {transform_indices = @transform_20, window_bounds = array<i64: 64, 128>}]} {
    %c0 = arith.constant 0 : index
    %c0_0 = arith.constant 0 : index
    %0 = vector.load %arg1[%c0, %c0_0] : memref<64x64xf32, #tpu.memory_space<vmem>>, vector<64x64xf32>
    %1 = arith.truncf %0 : vector<64x64xf32> to vector<64x64xbf16>
    %c0_1 = arith.constant 0 : index
    %c0_2 = arith.constant 0 : index
    %2 = vector.load %arg2[%c0_1, %c0_2] : memref<64x128xbf16, #tpu.memory_space<vmem>>, vector<64x128xbf16>
    %cst = arith.constant dense<0.000000e+00> : vector<64x128xf32>
    %3 = tpu.matmul %1, %2, %cst {dimension_numbers = #tpu.dot_dimension_numbers<[1], [0], [0], [1], [0, 0, 1, 1], [], []>} : vector<64x64xbf16>, vector<64x128xbf16>, vector<64x128xf32> -> vector<64x128xf32>
    %c0_3 = arith.constant 0 : index
    %c0_4 = arith.constant 0 : index
    %4 = vector.load %arg3[%c0_3, %c0_4] : memref<1x128xf32, #tpu.memory_space<vmem>>, vector<1x128xf32>
    %5 = vector.broadcast %4 : vector<1x128xf32> to vector<64x128xf32>
    %6 = arith.addf %3, %5 : vector<64x128xf32>
    %7 = vector.extract_strided_slice %6 {offsets = [0, 0], sizes = [64, 64], strides = [1, 1]} : vector<64x128xf32> to vector<64x64xf32>
    %c0_5 = arith.constant 0 : index
    %c0_6 = arith.constant 0 : index
    %8 = vector.load %arg4[%c0_5, %c0_6] : memref<1x64xf32, #tpu.memory_space<vmem>>, vector<1x64xf32>
    %c0_7 = arith.constant 0 : index
    %c0_8 = arith.constant 0 : index
    %9 = vector.load %arg5[%c0_7, %c0_8] : memref<1x64xf32, #tpu.memory_space<vmem>>, vector<1x64xf32>
    %cst_9 = arith.constant dense<0.000000e+00> : vector<64xf32>
    %10 = vector.multi_reduction <add>, %7, %cst_9 [1] : vector<64x64xf32> to vector<64xf32>
    %11 = vector.shape_cast %10 : vector<64xf32> to vector<64x1xf32>
    %cst_10 = arith.constant 6.400000e+01 : f32
    %12 = vector.broadcast %cst_10 : f32 to vector<64x1xf32>
    %13 = arith.divf %11, %12 : vector<64x1xf32>
    %14 = arith.mulf %7, %7 : vector<64x64xf32>
    %cst_11 = arith.constant dense<0.000000e+00> : vector<64xf32>
    %15 = vector.multi_reduction <add>, %14, %cst_11 [1] : vector<64x64xf32> to vector<64xf32>
    %16 = vector.shape_cast %15 : vector<64xf32> to vector<64x1xf32>
    %cst_12 = arith.constant 6.400000e+01 : f32
    %17 = vector.broadcast %cst_12 : f32 to vector<64x1xf32>
    %18 = arith.divf %16, %17 : vector<64x1xf32>
    %19 = arith.mulf %13, %13 : vector<64x1xf32>
    %20 = arith.subf %18, %19 : vector<64x1xf32>
    %cst_13 = arith.constant 0.000000e+00 : f32
    %21 = vector.broadcast %cst_13 : f32 to vector<64x1xf32>
    %22 = arith.maximumf %20, %21 : vector<64x1xf32>
    %23 = vector.broadcast %13 : vector<64x1xf32> to vector<64x64xf32>
    %24 = arith.subf %7, %23 : vector<64x64xf32>
    %cst_14 = arith.constant 9.99999974E-6 : f32
    %25 = vector.broadcast %cst_14 : f32 to vector<64x1xf32>
    %26 = arith.addf %22, %25 : vector<64x1xf32>
    %27 = math.rsqrt %26 : vector<64x1xf32>
    %28 = vector.broadcast %27 : vector<64x1xf32> to vector<64x64xf32>
    %29 = arith.mulf %24, %28 : vector<64x64xf32>
    %30 = vector.broadcast %8 : vector<1x64xf32> to vector<64x64xf32>
    %31 = arith.mulf %29, %30 : vector<64x64xf32>
    %32 = vector.broadcast %9 : vector<1x64xf32> to vector<64x64xf32>
    %33 = arith.addf %31, %32 : vector<64x64xf32>
    %cst_15 = arith.constant 0.000000e+00 : f32
    %34 = vector.broadcast %cst_15 : f32 to vector<64x64xf32>
    %35 = arith.maximumf %33, %34 : vector<64x64xf32>
    %36 = arith.truncf %35 : vector<64x64xf32> to vector<64x64xbf16>
    %c0_16 = arith.constant 0 : index
    %c0_17 = arith.constant 0 : index
    %37 = vector.load %arg6[%c0_16, %c0_17] : memref<64x32xbf16, #tpu.memory_space<vmem>>, vector<64x32xbf16>
    %cst_18 = arith.constant dense<0.000000e+00> : vector<64x32xf32>
    %38 = tpu.matmul %36, %37, %cst_18 {dimension_numbers = #tpu.dot_dimension_numbers<[1], [0], [0], [1], [0, 0, 1, 1], [], []>} : vector<64x64xbf16>, vector<64x32xbf16>, vector<64x32xf32> -> vector<64x32xf32>
    %c0_19 = arith.constant 0 : index
    %c0_20 = arith.constant 0 : index
    %39 = vector.load %arg7[%c0_19, %c0_20] : memref<1x32xf32, #tpu.memory_space<vmem>>, vector<1x32xf32>
    %40 = vector.broadcast %39 : vector<1x32xf32> to vector<64x32xf32>
    %41 = arith.addf %38, %40 : vector<64x32xf32>
    %42 = vector.extract_strided_slice %6 {offsets = [0, 64], sizes = [64, 16], strides = [1, 1]} : vector<64x128xf32> to vector<64x16xf32>
    %c0_21 = arith.constant 0 : index
    %c0_22 = arith.constant 0 : index
    %43 = vector.load %arg8[%c0_21, %c0_22] : memref<1x16xf32, #tpu.memory_space<vmem>>, vector<1x16xf32>
    %c0_23 = arith.constant 0 : index
    %c0_24 = arith.constant 0 : index
    %44 = vector.load %arg9[%c0_23, %c0_24] : memref<1x16xf32, #tpu.memory_space<vmem>>, vector<1x16xf32>
    %cst_25 = arith.constant dense<0.000000e+00> : vector<64xf32>
    %45 = vector.multi_reduction <add>, %42, %cst_25 [1] : vector<64x16xf32> to vector<64xf32>
    %46 = vector.shape_cast %45 : vector<64xf32> to vector<64x1xf32>
    %cst_26 = arith.constant 1.600000e+01 : f32
    %47 = vector.broadcast %cst_26 : f32 to vector<64x1xf32>
    %48 = arith.divf %46, %47 : vector<64x1xf32>
    %49 = arith.mulf %42, %42 : vector<64x16xf32>
    %cst_27 = arith.constant dense<0.000000e+00> : vector<64xf32>
    %50 = vector.multi_reduction <add>, %49, %cst_27 [1] : vector<64x16xf32> to vector<64xf32>
    %51 = vector.shape_cast %50 : vector<64xf32> to vector<64x1xf32>
    %cst_28 = arith.constant 1.600000e+01 : f32
    %52 = vector.broadcast %cst_28 : f32 to vector<64x1xf32>
    %53 = arith.divf %51, %52 : vector<64x1xf32>
    %54 = arith.mulf %48, %48 : vector<64x1xf32>
    %55 = arith.subf %53, %54 : vector<64x1xf32>
    %cst_29 = arith.constant 0.000000e+00 : f32
    %56 = vector.broadcast %cst_29 : f32 to vector<64x1xf32>
    %57 = arith.maximumf %55, %56 : vector<64x1xf32>
    %58 = vector.broadcast %48 : vector<64x1xf32> to vector<64x16xf32>
    %59 = arith.subf %42, %58 : vector<64x16xf32>
    %cst_30 = arith.constant 9.99999974E-6 : f32
    %60 = vector.broadcast %cst_30 : f32 to vector<64x1xf32>
    %61 = arith.addf %57, %60 : vector<64x1xf32>
    %62 = math.rsqrt %61 : vector<64x1xf32>
    %63 = vector.broadcast %62 : vector<64x1xf32> to vector<64x16xf32>
    %64 = arith.mulf %59, %63 : vector<64x16xf32>
    %65 = vector.broadcast %43 : vector<1x16xf32> to vector<64x16xf32>
    %66 = arith.mulf %64, %65 : vector<64x16xf32>
    %67 = vector.broadcast %44 : vector<1x16xf32> to vector<64x16xf32>
    %68 = arith.addf %66, %67 : vector<64x16xf32>
    %cst_31 = arith.constant 0.000000e+00 : f32
    %69 = vector.broadcast %cst_31 : f32 to vector<64x16xf32>
    %70 = arith.maximumf %68, %69 : vector<64x16xf32>
    %71 = arith.truncf %41 : vector<64x32xf32> to vector<64x32xbf16>
    %c0_32 = arith.constant 0 : index
    %c0_33 = arith.constant 0 : index
    %72 = vector.load %arg10[%c0_32, %c0_33] : memref<32x32xbf16, #tpu.memory_space<vmem>>, vector<32x32xbf16>
    %cst_34 = arith.constant dense<0.000000e+00> : vector<64x32xf32>
    %73 = tpu.matmul %71, %72, %cst_34 {dimension_numbers = #tpu.dot_dimension_numbers<[1], [0], [0], [1], [0, 0, 1, 1], [], []>} : vector<64x32xbf16>, vector<32x32xbf16>, vector<64x32xf32> -> vector<64x32xf32>
    %74 = arith.truncf %70 : vector<64x16xf32> to vector<64x16xbf16>
    %c0_35 = arith.constant 0 : index
    %c0_36 = arith.constant 0 : index
    %75 = vector.load %arg11[%c0_35, %c0_36] : memref<16x32xbf16, #tpu.memory_space<vmem>>, vector<16x32xbf16>
    %cst_37 = arith.constant dense<0.000000e+00> : vector<64x32xf32>
    %76 = tpu.matmul %74, %75, %cst_37 {dimension_numbers = #tpu.dot_dimension_numbers<[1], [0], [0], [1], [0, 0, 1, 1], [], []>} : vector<64x16xbf16>, vector<16x32xbf16>, vector<64x32xf32> -> vector<64x32xf32>
    %77 = arith.addf %73, %76 : vector<64x32xf32>
    %c0_38 = arith.constant 0 : index
    %c0_39 = arith.constant 0 : index
    %78 = vector.load %arg12[%c0_38, %c0_39] : memref<1x32xf32, #tpu.memory_space<vmem>>, vector<1x32xf32>
    %79 = vector.broadcast %78 : vector<1x32xf32> to vector<64x32xf32>
    %80 = arith.addf %77, %79 : vector<64x32xf32>
    %c0_40 = arith.constant 0 : index
    %c0_41 = arith.constant 0 : index
    %81 = vector.load %arg13[%c0_40, %c0_41] : memref<1x32xf32, #tpu.memory_space<vmem>>, vector<1x32xf32>
    %c0_42 = arith.constant 0 : index
    %c0_43 = arith.constant 0 : index
    %82 = vector.load %arg14[%c0_42, %c0_43] : memref<1x32xf32, #tpu.memory_space<vmem>>, vector<1x32xf32>
    %cst_44 = arith.constant dense<0.000000e+00> : vector<64xf32>
    %83 = vector.multi_reduction <add>, %80, %cst_44 [1] : vector<64x32xf32> to vector<64xf32>
    %84 = vector.shape_cast %83 : vector<64xf32> to vector<64x1xf32>
    %cst_45 = arith.constant 3.200000e+01 : f32
    %85 = vector.broadcast %cst_45 : f32 to vector<64x1xf32>
    %86 = arith.divf %84, %85 : vector<64x1xf32>
    %87 = arith.mulf %80, %80 : vector<64x32xf32>
    %cst_46 = arith.constant dense<0.000000e+00> : vector<64xf32>
    %88 = vector.multi_reduction <add>, %87, %cst_46 [1] : vector<64x32xf32> to vector<64xf32>
    %89 = vector.shape_cast %88 : vector<64xf32> to vector<64x1xf32>
    %cst_47 = arith.constant 3.200000e+01 : f32
    %90 = vector.broadcast %cst_47 : f32 to vector<64x1xf32>
    %91 = arith.divf %89, %90 : vector<64x1xf32>
    %92 = arith.mulf %86, %86 : vector<64x1xf32>
    %93 = arith.subf %91, %92 : vector<64x1xf32>
    %cst_48 = arith.constant 0.000000e+00 : f32
    %94 = vector.broadcast %cst_48 : f32 to vector<64x1xf32>
    %95 = arith.maximumf %93, %94 : vector<64x1xf32>
    %96 = vector.broadcast %86 : vector<64x1xf32> to vector<64x32xf32>
    %97 = arith.subf %80, %96 : vector<64x32xf32>
    %cst_49 = arith.constant 9.99999974E-6 : f32
    %98 = vector.broadcast %cst_49 : f32 to vector<64x1xf32>
    %99 = arith.addf %95, %98 : vector<64x1xf32>
    %100 = math.rsqrt %99 : vector<64x1xf32>
    %101 = vector.broadcast %100 : vector<64x1xf32> to vector<64x32xf32>
    %102 = arith.mulf %97, %101 : vector<64x32xf32>
    %103 = vector.broadcast %81 : vector<1x32xf32> to vector<64x32xf32>
    %104 = arith.mulf %102, %103 : vector<64x32xf32>
    %105 = vector.broadcast %82 : vector<1x32xf32> to vector<64x32xf32>
    %106 = arith.addf %104, %105 : vector<64x32xf32>
    %cst_50 = arith.constant 0.000000e+00 : f32
    %107 = vector.broadcast %cst_50 : f32 to vector<64x32xf32>
    %108 = arith.maximumf %106, %107 : vector<64x32xf32>
    %c0_51 = arith.constant 0 : index
    %c0_52 = arith.constant 0 : index
    %109 = vector.load %arg15[%c0_51, %c0_52] : memref<32x16xbf16, #tpu.memory_space<vmem>>, vector<32x16xbf16>
    %c0_53 = arith.constant 0 : index
    %c0_54 = arith.constant 0 : index
    %110 = vector.load %arg16[%c0_53, %c0_54] : memref<1x16xf32, #tpu.memory_space<vmem>>, vector<1x16xf32>
    %c0_55 = arith.constant 0 : index
    %c0_56 = arith.constant 0 : index
    %111 = vector.load %arg17[%c0_55, %c0_56] : memref<1x16xf32, #tpu.memory_space<vmem>>, vector<1x16xf32>
    %c0_57 = arith.constant 0 : index
    %c0_58 = arith.constant 0 : index
    %112 = vector.load %arg18[%c0_57, %c0_58] : memref<1x16xf32, #tpu.memory_space<vmem>>, vector<1x16xf32>
    %c0_59 = arith.constant 0 : index
    %c0_60 = arith.constant 0 : index
    %113 = vector.load %arg19[%c0_59, %c0_60] : memref<16x128xbf16, #tpu.memory_space<vmem>>, vector<16x128xbf16>
    %c0_61 = arith.constant 0 : index
    %c0_62 = arith.constant 0 : index
    %114 = vector.load %arg20[%c0_61, %c0_62] : memref<1x128xf32, #tpu.memory_space<vmem>>, vector<1x128xf32>
    %115 = arith.truncf %108 : vector<64x32xf32> to vector<64x32xbf16>
    %cst_63 = arith.constant dense<0.000000e+00> : vector<64x16xf32>
    %116 = tpu.matmul %115, %109, %cst_63 {dimension_numbers = #tpu.dot_dimension_numbers<[1], [0], [0], [1], [0, 0, 1, 1], [], []>} : vector<64x32xbf16>, vector<32x16xbf16>, vector<64x16xf32> -> vector<64x16xf32>
    %117 = vector.broadcast %110 : vector<1x16xf32> to vector<64x16xf32>
    %118 = arith.addf %116, %117 : vector<64x16xf32>
    %cst_64 = arith.constant dense<0.000000e+00> : vector<64xf32>
    %119 = vector.multi_reduction <add>, %118, %cst_64 [1] : vector<64x16xf32> to vector<64xf32>
    %120 = vector.shape_cast %119 : vector<64xf32> to vector<64x1xf32>
    %cst_65 = arith.constant 1.600000e+01 : f32
    %121 = vector.broadcast %cst_65 : f32 to vector<64x1xf32>
    %122 = arith.divf %120, %121 : vector<64x1xf32>
    %123 = arith.mulf %118, %118 : vector<64x16xf32>
    %cst_66 = arith.constant dense<0.000000e+00> : vector<64xf32>
    %124 = vector.multi_reduction <add>, %123, %cst_66 [1] : vector<64x16xf32> to vector<64xf32>
    %125 = vector.shape_cast %124 : vector<64xf32> to vector<64x1xf32>
    %cst_67 = arith.constant 1.600000e+01 : f32
    %126 = vector.broadcast %cst_67 : f32 to vector<64x1xf32>
    %127 = arith.divf %125, %126 : vector<64x1xf32>
    %128 = arith.mulf %122, %122 : vector<64x1xf32>
    %129 = arith.subf %127, %128 : vector<64x1xf32>
    %cst_68 = arith.constant 0.000000e+00 : f32
    %130 = vector.broadcast %cst_68 : f32 to vector<64x1xf32>
    %131 = arith.maximumf %129, %130 : vector<64x1xf32>
    %132 = vector.broadcast %122 : vector<64x1xf32> to vector<64x16xf32>
    %133 = arith.subf %118, %132 : vector<64x16xf32>
    %cst_69 = arith.constant 9.99999974E-6 : f32
    %134 = vector.broadcast %cst_69 : f32 to vector<64x1xf32>
    %135 = arith.addf %131, %134 : vector<64x1xf32>
    %136 = math.rsqrt %135 : vector<64x1xf32>
    %137 = vector.broadcast %136 : vector<64x1xf32> to vector<64x16xf32>
    %138 = arith.mulf %133, %137 : vector<64x16xf32>
    %139 = vector.broadcast %111 : vector<1x16xf32> to vector<64x16xf32>
    %140 = arith.mulf %138, %139 : vector<64x16xf32>
    %141 = vector.broadcast %112 : vector<1x16xf32> to vector<64x16xf32>
    %142 = arith.addf %140, %141 : vector<64x16xf32>
    %cst_70 = arith.constant 0.000000e+00 : f32
    %143 = vector.broadcast %cst_70 : f32 to vector<64x16xf32>
    %144 = arith.maximumf %142, %143 : vector<64x16xf32>
    %145 = arith.truncf %144 : vector<64x16xf32> to vector<64x16xbf16>
    %cst_71 = arith.constant dense<0.000000e+00> : vector<64x128xf32>
    %146 = tpu.matmul %145, %113, %cst_71 {dimension_numbers = #tpu.dot_dimension_numbers<[1], [0], [0], [1], [0, 0, 1, 1], [], []>} : vector<64x16xbf16>, vector<16x128xbf16>, vector<64x128xf32> -> vector<64x128xf32>
    %147 = vector.broadcast %114 : vector<1x128xf32> to vector<64x128xf32>
    %148 = arith.addf %146, %147 : vector<64x128xf32>
    %cst_72 = arith.constant dense<0xFF800000> : vector<64xf32>
    %149 = vector.multi_reduction <maximumf>, %148, %cst_72 [1] : vector<64x128xf32> to vector<64xf32>
    %150 = vector.shape_cast %149 : vector<64xf32> to vector<64x1xf32>
    %151 = vector.broadcast %150 : vector<64x1xf32> to vector<64x128xf32>
    %152 = arith.subf %148, %151 : vector<64x128xf32>
    %153 = math.exp %152 : vector<64x128xf32>
    %cst_73 = arith.constant dense<0.000000e+00> : vector<64xf32>
    %154 = vector.multi_reduction <add>, %153, %cst_73 [1] : vector<64x128xf32> to vector<64xf32>
    %155 = vector.shape_cast %154 : vector<64xf32> to vector<64x1xf32>
    %156 = math.log %155 : vector<64x1xf32>
    %157 = vector.broadcast %156 : vector<64x1xf32> to vector<64x128xf32>
    %158 = arith.subf %152, %157 : vector<64x128xf32>
    %c0_74 = arith.constant 0 : index
    %c0_75 = arith.constant 0 : index
    %159 = vector.load %arg21[%c0_74, %c0_75] : memref<64x128xf32, #tpu.memory_space<vmem>>, vector<64x128xf32>
    tpu.vector_store %arg21[%c0_74, %c0_75], %158 {strides = array<i32>} : memref<64x128xf32, #tpu.memory_space<vmem>>, vector<64x128xf32>,
    return
  }
  func.func @transform_0(%arg0: i32) -> (i32, i32) {
    %c0_i32 = arith.constant 0 : i32
    %c0_i32_0 = arith.constant 0 : i32
    return %arg0, %c0_i32 : i32, i32
  }
  func.func @transform_1(%arg0: i32) -> (i32, i32) {
    %c0_i32 = arith.constant 0 : i32
    %c0_i32_0 = arith.constant 0 : i32
    %c0_i32_1 = arith.constant 0 : i32
    return %c0_i32, %c0_i32_0 : i32, i32
  }
  func.func @transform_2(%arg0: i32) -> (i32, i32) {
    %c0_i32 = arith.constant 0 : i32
    %c0_i32_0 = arith.constant 0 : i32
    %c0_i32_1 = arith.constant 0 : i32
    return %c0_i32, %c0_i32_0 : i32, i32
  }
  func.func @transform_3(%arg0: i32) -> (i32, i32) {
    %c0_i32 = arith.constant 0 : i32
    %c0_i32_0 = arith.constant 0 : i32
    %c0_i32_1 = arith.constant 0 : i32
    return %c0_i32, %c0_i32_0 : i32, i32
  }
  func.func @transform_4(%arg0: i32) -> (i32, i32) {
    %c0_i32 = arith.constant 0 : i32
    %c0_i32_0 = arith.constant 0 : i32
    %c0_i32_1 = arith.constant 0 : i32
    return %c0_i32, %c0_i32_0 : i32, i32
  }
  func.func @transform_5(%arg0: i32) -> (i32, i32) {
    %c0_i32 = arith.constant 0 : i32
    %c0_i32_0 = arith.constant 0 : i32
    %c0_i32_1 = arith.constant 0 : i32
    return %c0_i32, %c0_i32_0 : i32, i32
  }
  func.func @transform_6(%arg0: i32) -> (i32, i32) {
    %c0_i32 = arith.constant 0 : i32
    %c0_i32_0 = arith.constant 0 : i32
    %c0_i32_1 = arith.constant 0 : i32
    return %c0_i32, %c0_i32_0 : i32, i32
  }
  func.func @transform_7(%arg0: i32) -> (i32, i32) {
    %c0_i32 = arith.constant 0 : i32
    %c0_i32_0 = arith.constant 0 : i32
    %c0_i32_1 = arith.constant 0 : i32
    return %c0_i32, %c0_i32_0 : i32, i32
  }
  func.func @transform_8(%arg0: i32) -> (i32, i32) {
    %c0_i32 = arith.constant 0 : i32
    %c0_i32_0 = arith.constant 0 : i32
    %c0_i32_1 = arith.constant 0 : i32
    return %c0_i32, %c0_i32_0 : i32, i32
  }
  func.func @transform_9(%arg0: i32) -> (i32, i32) {
    %c0_i32 = arith.constant 0 : i32
    %c0_i32_0 = arith.constant 0 : i32
    %c0_i32_1 = arith.constant 0 : i32
    return %c0_i32, %c0_i32_0 : i32, i32
  }
  func.func @transform_10(%arg0: i32) -> (i32, i32) {
    %c0_i32 = arith.constant 0 : i32
    %c0_i32_0 = arith.constant 0 : i32
    %c0_i32_1 = arith.constant 0 : i32
    return %c0_i32, %c0_i32_0 : i32, i32
  }
  func.func @transform_11(%arg0: i32) -> (i32, i32) {
    %c0_i32 = arith.constant 0 : i32
    %c0_i32_0 = arith.constant 0 : i32
    %c0_i32_1 = arith.constant 0 : i32
    return %c0_i32, %c0_i32_0 : i32, i32
  }
  func.func @transform_12(%arg0: i32) -> (i32, i32) {
    %c0_i32 = arith.constant 0 : i32
    %c0_i32_0 = arith.constant 0 : i32
    %c0_i32_1 = arith.constant 0 : i32
    return %c0_i32, %c0_i32_0 : i32, i32
  }
  func.func @transform_13(%arg0: i32) -> (i32, i32) {
    %c0_i32 = arith.constant 0 : i32
    %c0_i32_0 = arith.constant 0 : i32
    %c0_i32_1 = arith.constant 0 : i32
    return %c0_i32, %c0_i32_0 : i32, i32
  }
  func.func @transform_14(%arg0: i32) -> (i32, i32) {
    %c0_i32 = arith.constant 0 : i32
    %c0_i32_0 = arith.constant 0 : i32
    %c0_i32_1 = arith.constant 0 : i32
    return %c0_i32, %c0_i32_0 : i32, i32
  }
  func.func @transform_15(%arg0: i32) -> (i32, i32) {
    %c0_i32 = arith.constant 0 : i32
    %c0_i32_0 = arith.constant 0 : i32
    %c0_i32_1 = arith.constant 0 : i32
    return %c0_i32, %c0_i32_0 : i32, i32
  }
  func.func @transform_16(%arg0: i32) -> (i32, i32) {
    %c0_i32 = arith.constant 0 : i32
    %c0_i32_0 = arith.constant 0 : i32
    %c0_i32_1 = arith.constant 0 : i32
    return %c0_i32, %c0_i32_0 : i32, i32
  }
  func.func @transform_17(%arg0: i32) -> (i32, i32) {
    %c0_i32 = arith.constant 0 : i32
    %c0_i32_0 = arith.constant 0 : i32
    %c0_i32_1 = arith.constant 0 : i32
    return %c0_i32, %c0_i32_0 : i32, i32
  }
  func.func @transform_18(%arg0: i32) -> (i32, i32) {
    %c0_i32 = arith.constant 0 : i32
    %c0_i32_0 = arith.constant 0 : i32
    %c0_i32_1 = arith.constant 0 : i32
    return %c0_i32, %c0_i32_0 : i32, i32
  }
  func.func @transform_19(%arg0: i32) -> (i32, i32) {
    %c0_i32 = arith.constant 0 : i32
    %c0_i32_0 = arith.constant 0 : i32
    %c0_i32_1 = arith.constant 0 : i32
    return %c0_i32, %c0_i32_0 : i32, i32
  }
  func.func @transform_20(%arg0: i32) -> (i32, i32) {
    %c0_i32 = arith.constant 0 : i32
    %c0_i32_0 = arith.constant 0 : i32
    return %arg0, %c0_i32 : i32, i32
  }
}

</mosaic_0001>

<llo_original>
// kernel: tpu_custom_call.1
$region0: #{tpu_custom_call.1}
  #allocation0 [shape = 'u32[]', space=smem, size = 0x4, offset = 0x4, fixed_abs, tag = 'smem constant byte address 0x4 - core index']
  #allocation1 [shape = 'u32[72,128]{1,0:T(1,128)}', space=vmem, size = 0x9000, scoped, tag = 'internal scratch']
  %s0 = inlined_call_operand.hbm [shape: f32[64,64], index: 0, kind: input, shape index: {}]
  %s1 = inlined_call_operand.vmem [shape: bf16[64,128], index: 1, kind: input, shape index: {}]
  %s2 = inlined_call_operand.hbm [shape: f32[1,128], index: 2, kind: input, shape index: {}]
  %s3 = inlined_call_operand.hbm [shape: f32[1,64], index: 3, kind: input, shape index: {}]
  %s4 = inlined_call_operand.hbm [shape: f32[1,64], index: 4, kind: input, shape index: {}]
  %s5 = inlined_call_operand.vmem [shape: bf16[64,32], index: 5, kind: input, shape index: {}]
  %s6 = inlined_call_operand.hbm [shape: f32[1,32], index: 6, kind: input, shape index: {}]
  %s7 = inlined_call_operand.hbm [shape: f32[1,16], index: 7, kind: input, shape index: {}]
  %s8 = inlined_call_operand.hbm [shape: f32[1,16], index: 8, kind: input, shape index: {}]
  %s9 = inlined_call_operand.vmem [shape: bf16[32,32], index: 9, kind: input, shape index: {}]
  %s10 = inlined_call_operand.vmem [shape: bf16[16,32], index: 10, kind: input, shape index: {}]
  %s11 = inlined_call_operand.hbm [shape: f32[1,32], index: 11, kind: input, shape index: {}]
  %s12 = inlined_call_operand.hbm [shape: f32[1,32], index: 12, kind: input, shape index: {}]
  %s13 = inlined_call_operand.hbm [shape: f32[1,32], index: 13, kind: input, shape index: {}]
  %s14 = inlined_call_operand.vmem [shape: bf16[32,16], index: 14, kind: input, shape index: {}]
  %s15 = inlined_call_operand.hbm [shape: f32[1,16], index: 15, kind: input, shape index: {}]
  %s16 = inlined_call_operand.hbm [shape: f32[1,16], index: 16, kind: input, shape index: {}]
  %s17 = inlined_call_operand.hbm [shape: f32[1,16], index: 17, kind: input, shape index: {}]
  %s18 = inlined_call_operand.vmem [shape: bf16[16,128], index: 18, kind: input, shape index: {}]
  %s19 = inlined_call_operand.vmem [shape: f32[1,128], index: 19, kind: input, shape index: {}]
  %s20 = inlined_call_operand.hbm [shape: f32[64,128], index: 20, kind: output, shape index: {}]
  %s21 = sld [smem:[#allocation0]]
  $region142: #{tpu_custom_call.1} parent=0
    _
  %s23 = ssub.s32 1, %s21
  %s24 = scalar_select 0, %s23, %s21
  $region1: #{tpu_custom_call.1} parent=0
    #allocation2 [shape = 'u8[32768]{0}', space=vmem, size = 0x8000, scoped, tag = 'input window, operand 0, single buffered']
    #allocation3 [shape = 's32[1]{0}', space=sflag, size = 0x4, scoped, tag = 'scoped memory for tpu_custom_call.1']
    #allocation4 [shape = 's32[1]{0}', space=sflag, size = 0x4, scoped, tag = 'scoped memory for tpu_custom_call.1']
    #allocation5 [shape = 'u8[512]{0}', space=vmem, size = 0x400, scoped, tag = 'input window, operand 2, single buffered']
    #allocation6 [shape = 's32[1]{0}', space=sflag, size = 0x4, scoped, tag = 'scoped memory for tpu_custom_call.1']
    #allocation7 [shape = 'u8[512]{0}', space=vmem, size = 0x400, scoped, tag = 'input window, operand 3, single buffered']
    #allocation8 [shape = 'u8[512]{0}', space=vmem, size = 0x400, scoped, tag = 'input window, operand 4, single buffered']
    #allocation9 [shape = 's32[1]{0}', space=sflag, size = 0x4, scoped, tag = 'scoped memory for tpu_custom_call.1']
    #allocation10 [shape = 'u8[512]{0}', space=vmem, size = 0x400, scoped, tag = 'input window, operand 6, single buffered']
    #allocation11 [shape = 'u8[512]{0}', space=vmem, size = 0x400, scoped, tag = 'input window, operand 7, single buffered']
    #allocation12 [shape = 's32[1]{0}', space=sflag, size = 0x4, scoped, tag = 'scoped memory for tpu_custom_call.1']
    #allocation13 [shape = 'u8[512]{0}', space=vmem, size = 0x400, scoped, tag = 'input window, operand 8, single buffered']
    #allocation14 [shape = 'u8[512]{0}', space=vmem, size = 0x400, scoped, tag = 'input window, operand 11, single buffered']
    #allocation15 [shape = 's32[1]{0}', space=sflag, size = 0x4, scoped, tag = 'scoped memory for tpu_custom_call.1']
    #allocation16 [shape = 'u8[512]{0}', space=vmem, size = 0x400, scoped, tag = 'input window, operand 12, single buffered']
    #allocation17 [shape = 'u8[512]{0}', space=vmem, size = 0x400, scoped, tag = 'input window, operand 13, single buffered']
    #allocation18 [shape = 's32[1]{0}', space=sflag, size = 0x4, scoped, tag = 'scoped memory for tpu_custom_call.1']
    #allocation19 [shape = 'u8[512]{0}', space=vmem, size = 0x400, scoped, tag = 'input window, operand 15, single buffered']
    #allocation20 [shape = 'u8[512]{0}', space=vmem, size = 0x400, scoped, tag = 'input window, operand 16, single buffered']
    #allocation21 [shape = 's32[1]{0}', space=sflag, size = 0x4, scoped, tag = 'scoped memory for tpu_custom_call.1']
    #allocation22 [shape = 'u8[512]{0}', space=vmem, size = 0x400, scoped, tag = 'input window, operand 17, single buffered']
    #allocation23 [shape = 'u8[32768]{0}', space=vmem, size = 0x8000, scoped, tag = 'output window, operand 0, single buffered']
    %25 = vsyncpa [#allocation3], 0
    %26 = vsyncpa [#allocation6], 0
    %27 = vsyncpa [#allocation9], 0
    %28 = vsyncpa [#allocation12], 0
    %29 = vsyncpa [#allocation15], 0
    %30 = vsyncpa [#allocation18], 0
    %31 = vsyncpa [#allocation21], 0
    %32 = vsyncpa [#allocation4], 0
    // Predicated region
    $region2: #{tpu_custom_call.1} parent=1 // pred_check
      _
    $region3: #{tpu_custom_call.1} parent=1 // pred_check_branch
      %34 = sbr.rel (0) target = $region5
    $region4: #{tpu_custom_call.1} parent=1 // pred_region
      %36 = vsyncadd [#allocation3], 0
      %s37 = sshll.u32 %s0, 4
      %s38 = int_to_ptr.hbm [resolvable:$true] %s37
      %s39 = sshll.u32 [#allocation2], 4
      %s40 = int_to_ptr.vmem [resolvable:$true] %s39
      %45 = dma.hbm_to_vmem [thread:$0]  %s38, 1024, %s40, [#allocation3], 128, 128, 8
    $region5: #{tpu_custom_call.1} parent=1 // pred_fallthru
      _
    // Predicated region
    $region6: #{tpu_custom_call.1} parent=1 // pred_check
      _
    $region7: #{tpu_custom_call.1} parent=1 // pred_check_branch
      %47 = sbr.rel (0) target = $region9
    $region8: #{tpu_custom_call.1} parent=1 // pred_region
      _
    $region9: #{tpu_custom_call.1} parent=1 // pred_fallthru
      _
    // Predicated region
    $region10: #{tpu_custom_call.1} parent=1 // pred_check
      _
    $region11: #{tpu_custom_call.1} parent=1 // pred_check_branch
      %49 = sbr.rel (0) target = $region13
    $region12: #{tpu_custom_call.1} parent=1 // pred_region
      %51 = vsyncadd [#allocation6], 0
      %s53 = sshll.u32 %s2, 4
      %s54 = int_to_ptr.hbm [resolvable:$true] %s53
      %s55 = sshll.u32 [#allocation5], 4
      %s56 = int_to_ptr.vmem [resolvable:$true] %s55
      %58 = dma.hbm_to_vmem [thread:$0]  %s54, 16, %s56, [#allocation6]
    $region13: #{tpu_custom_call.1} parent=1 // pred_fallthru
      _
    // Predicated region
    $region14: #{tpu_custom_call.1} parent=1 // pred_check
      _
    $region15: #{tpu_custom_call.1} parent=1 // pred_check_branch
      %60 = sbr.rel (0) target = $region17
    $region16: #{tpu_custom_call.1} parent=1 // pred_region
      %62 = vsyncadd [#allocation6], 0
      %s64 = sshll.u32 %s3, 4
      %s65 = int_to_ptr.hbm [resolvable:$true] %s64
      %s66 = sshll.u32 [#allocation7], 4
      %s67 = int_to_ptr.vmem [resolvable:$true] %s66
      %69 = dma.hbm_to_vmem [thread:$0]  %s65, 16, %s67, [#allocation6]
    $region17: #{tpu_custom_call.1} parent=1 // pred_fallthru
      _
    // Predicated region
    $region18: #{tpu_custom_call.1} parent=1 // pred_check
      _
    $region19: #{tpu_custom_call.1} parent=1 // pred_check_branch
      %71 = sbr.rel (0) target = $region21
    $region20: #{tpu_custom_call.1} parent=1 // pred_region
      %73 = vsyncadd [#allocation9], 0
      %s75 = sshll.u32 %s4, 4
      %s76 = int_to_ptr.hbm [resolvable:$true] %s75
      %s77 = sshll.u32 [#allocation8], 4
      %s78 = int_to_ptr.vmem [resolvable:$true] %s77
      %80 = dma.hbm_to_vmem [thread:$0]  %s76, 16, %s78, [#allocation9]
    $region21: #{tpu_custom_call.1} parent=1 // pred_fallthru
      _
    // Predicated region
    $region22: #{tpu_custom_call.1} parent=1 // pred_check
      _
    $region23: #{tpu_custom_call.1} parent=1 // pred_check_branch
      %82 = sbr.rel (0) target = $region25
    $region24: #{tpu_custom_call.1} parent=1 // pred_region
      _
    $region25: #{tpu_custom_call.1} parent=1 // pred_fallthru
      _
    // Predicated region
    $region26: #{tpu_custom_call.1} parent=1 // pred_check
      _
    $region27: #{tpu_custom_call.1} parent=1 // pred_check_branch
      %84 = sbr.rel (0) target = $region29
    $region28: #{tpu_custom_call.1} parent=1 // pred_region
      %86 = vsyncadd [#allocation9], 0
      %s88 = sshll.u32 %s6, 4
      %s89 = int_to_ptr.hbm [resolvable:$true] %s88
      %s90 = sshll.u32 [#allocation10], 4
      %s91 = int_to_ptr.vmem [resolvable:$true] %s90
      %93 = dma.hbm_to_vmem [thread:$0]  %s89, 16, %s91, [#allocation9]
    $region29: #{tpu_custom_call.1} parent=1 // pred_fallthru
      _
    // Predicated region
    $region30: #{tpu_custom_call.1} parent=1 // pred_check
      _
    $region31: #{tpu_custom_call.1} parent=1 // pred_check_branch
      %95 = sbr.rel (0) target = $region33
    $region32: #{tpu_custom_call.1} parent=1 // pred_region
      %97 = vsyncadd [#allocation12], 0
      %s99 = sshll.u32 %s7, 4
      %s100 = int_to_ptr.hbm [resolvable:$true] %s99
      %s101 = sshll.u32 [#allocation11], 4
      %s102 = int_to_ptr.vmem [resolvable:$true] %s101
      %104 = dma.hbm_to_vmem [thread:$0]  %s100, 16, %s102, [#allocation12]
    $region33: #{tpu_custom_call.1} parent=1 // pred_fallthru
      _
    // Predicated region
    $region34: #{tpu_custom_call.1} parent=1 // pred_check
      _
    $region35: #{tpu_custom_call.1} parent=1 // pred_check_branch
      %106 = sbr.rel (0) target = $region37
    $region36: #{tpu_custom_call.1} parent=1 // pred_region
      %108 = vsyncadd [#allocation12], 0
      %s110 = sshll.u32 %s8, 4
      %s111 = int_to_ptr.hbm [resolvable:$true] %s110
      %s112 = sshll.u32 [#allocation13], 4
      %s113 = int_to_ptr.vmem [resolvable:$true] %s112
      %115 = dma.hbm_to_vmem [thread:$0]  %s111, 16, %s113, [#allocation12]
    $region37: #{tpu_custom_call.1} parent=1 // pred_fallthru
      _
    // Predicated region
    $region38: #{tpu_custom_call.1} parent=1 // pred_check
      _
    $region39: #{tpu_custom_call.1} parent=1 // pred_check_branch
      %117 = sbr.rel (0) target = $region41
    $region40: #{tpu_custom_call.1} parent=1 // pred_region
      _
    $region41: #{tpu_custom_call.1} parent=1 // pred_fallthru
      _
    // Predicated region
    $region42: #{tpu_custom_call.1} parent=1 // pred_check
      _
    $region43: #{tpu_custom_call.1} parent=1 // pred_check_branch
      %119 = sbr.rel (0) target = $region45
    $region44: #{tpu_custom_call.1} parent=1 // pred_region
      _
    $region45: #{tpu_custom_call.1} parent=1 // pred_fallthru
      _
    // Predicated region
    $region46: #{tpu_custom_call.1} parent=1 // pred_check
      _
    $region47: #{tpu_custom_call.1} parent=1 // pred_check_branch
      %121 = sbr.rel (0) target = $region49
    $region48: #{tpu_custom_call.1} parent=1 // pred_region
      %123 = vsyncadd [#allocation15], 0
      %s125 = sshll.u32 %s11, 4
      %s126 = int_to_ptr.hbm [resolvable:$true] %s125
      %s127 = sshll.u32 [#allocation14], 4
      %s128 = int_to_ptr.vmem [resolvable:$true] %s127
      %130 = dma.hbm_to_vmem [thread:$0]  %s126, 16, %s128, [#allocation15]
    $region49: #{tpu_custom_call.1} parent=1 // pred_fallthru
      _
    // Predicated region
    $region50: #{tpu_custom_call.1} parent=1 // pred_check
      _
    $region51: #{tpu_custom_call.1} parent=1 // pred_check_branch
      %132 = sbr.rel (0) target = $region53
    $region52: #{tpu_custom_call.1} parent=1 // pred_region
      %134 = vsyncadd [#allocation15], 0
      %s136 = sshll.u32 %s12, 4
      %s137 = int_to_ptr.hbm [resolvable:$true] %s136
      %s138 = sshll.u32 [#allocation16], 4
      %s139 = int_to_ptr.vmem [resolvable:$true] %s138
      %141 = dma.hbm_to_vmem [thread:$0]  %s137, 16, %s139, [#allocation15]
    $region53: #{tpu_custom_call.1} parent=1 // pred_fallthru
      _
    // Predicated region
    $region54: #{tpu_custom_call.1} parent=1 // pred_check
      _
    $region55: #{tpu_custom_call.1} parent=1 // pred_check_branch
      %143 = sbr.rel (0) target = $region57
    $region56: #{tpu_custom_call.1} parent=1 // pred_region
      %145 = vsyncadd [#allocation18], 0
      %s147 = sshll.u32 %s13, 4
      %s148 = int_to_ptr.hbm [resolvable:$true] %s147
      %s149 = sshll.u32 [#allocation17], 4
      %s150 = int_to_ptr.vmem [resolvable:$true] %s149
      %152 = dma.hbm_to_vmem [thread:$0]  %s148, 16, %s150, [#allocation18]
    $region57: #{tpu_custom_call.1} parent=1 // pred_fallthru
      _
    // Predicated region
    $region58: #{tpu_custom_call.1} parent=1 // pred_check
      _
    $region59: #{tpu_custom_call.1} parent=1 // pred_check_branch
      %154 = sbr.rel (0) target = $region61
    $region60: #{tpu_custom_call.1} parent=1 // pred_region
      _
    $region61: #{tpu_custom_call.1} parent=1 // pred_fallthru
      _
    // Predicated region
    $region62: #{tpu_custom_call.1} parent=1 // pred_check
      _
    $region63: #{tpu_custom_call.1} parent=1 // pred_check_branch
      %156 = sbr.rel (0) target = $region65
    $region64: #{tpu_custom_call.1} parent=1 // pred_region
      %158 = vsyncadd [#allocation18], 0
      %s160 = sshll.u32 %s15, 4
      %s161 = int_to_ptr.hbm [resolvable:$true] %s160
      %s162 = sshll.u32 [#allocation19], 4
      %s163 = int_to_ptr.vmem [resolvable:$true] %s162
      %165 = dma.hbm_to_vmem [thread:$0]  %s161, 16, %s163, [#allocation18]
    $region65: #{tpu_custom_call.1} parent=1 // pred_fallthru
      _
    // Predicated region
    $region66: #{tpu_custom_call.1} parent=1 // pred_check
      _
    $region67: #{tpu_custom_call.1} parent=1 // pred_check_branch
      %167 = sbr.rel (0) target = $region69
    $region68: #{tpu_custom_call.1} parent=1 // pred_region
      %169 = vsyncadd [#allocation21], 0
      %s171 = sshll.u32 %s16, 4
      %s172 = int_to_ptr.hbm [resolvable:$true] %s171
      %s173 = sshll.u32 [#allocation20], 4
      %s174 = int_to_ptr.vmem [resolvable:$true] %s173
      %176 = dma.hbm_to_vmem [thread:$0]  %s172, 16, %s174, [#allocation21]
    $region69: #{tpu_custom_call.1} parent=1 // pred_fallthru
      _
    // Predicated region
    $region70: #{tpu_custom_call.1} parent=1 // pred_check
      _
    $region71: #{tpu_custom_call.1} parent=1 // pred_check_branch
      %178 = sbr.rel (0) target = $region73
    $region72: #{tpu_custom_call.1} parent=1 // pred_region
      %180 = vsyncadd [#allocation21], 0
      %s182 = sshll.u32 %s17, 4
      %s183 = int_to_ptr.hbm [resolvable:$true] %s182
      %s184 = sshll.u32 [#allocation22], 4
      %s185 = int_to_ptr.vmem [resolvable:$true] %s184
      %187 = dma.hbm_to_vmem [thread:$0]  %s183, 16, %s185, [#allocation21]
    $region73: #{tpu_custom_call.1} parent=1 // pred_fallthru
      _
    // Predicated region
    $region74: #{tpu_custom_call.1} parent=1 // pred_check
      _
    $region75: #{tpu_custom_call.1} parent=1 // pred_check_branch
      %189 = sbr.rel (0) target = $region77
    $region76: #{tpu_custom_call.1} parent=1 // pred_region
      _
    $region77: #{tpu_custom_call.1} parent=1 // pred_fallthru
      _
    // Predicated region
    $region78: #{tpu_custom_call.1} parent=1 // pred_check
      _
    $region79: #{tpu_custom_call.1} parent=1 // pred_check_branch
      %191 = sbr.rel (0) target = $region81
    $region80: #{tpu_custom_call.1} parent=1 // pred_region
      _
    $region81: #{tpu_custom_call.1} parent=1 // pred_fallthru
      _
    // Predicated region
    $region82: #{tpu_custom_call.1} parent=1 // pred_check
      _
    $region83: #{tpu_custom_call.1} parent=1 // pred_check_branch
      %193 = sbr.rel (0) target = $region85
    $region84: #{tpu_custom_call.1} parent=1 // pred_region
      %195 = dma.done [#allocation3], 1024
    $region85: #{tpu_custom_call.1} parent=1 // pred_fallthru
      _
    // Predicated region
    $region86: #{tpu_custom_call.1} parent=1 // pred_check
      _
    $region87: #{tpu_custom_call.1} parent=1 // pred_check_branch
      %197 = sbr.rel (0) target = $region89
    $region88: #{tpu_custom_call.1} parent=1 // pred_region
      %199 = dma.done [#allocation6], 16
    $region89: #{tpu_custom_call.1} parent=1 // pred_fallthru
      _
    // Predicated region
    $region90: #{tpu_custom_call.1} parent=1 // pred_check
      _
    $region91: #{tpu_custom_call.1} parent=1 // pred_check_branch
      %201 = sbr.rel (0) target = $region93
    $region92: #{tpu_custom_call.1} parent=1 // pred_region
      %203 = dma.done [#allocation6], 16
    $region93: #{tpu_custom_call.1} parent=1 // pred_fallthru
      _
    // Predicated region
    $region94: #{tpu_custom_call.1} parent=1 // pred_check
      _
    $region95: #{tpu_custom_call.1} parent=1 // pred_check_branch
      %205 = sbr.rel (0) target = $region97
    $region96: #{tpu_custom_call.1} parent=1 // pred_region
      %207 = dma.done [#allocation9], 16
    $region97: #{tpu_custom_call.1} parent=1 // pred_fallthru
      _
    // Predicated region
    $region98: #{tpu_custom_call.1} parent=1 // pred_check
      _
    $region99: #{tpu_custom_call.1} parent=1 // pred_check_branch
      %209 = sbr.rel (0) target = $region101
    $region100: #{tpu_custom_call.1} parent=1 // pred_region
      %211 = dma.done [#allocation9], 16
    $region101: #{tpu_custom_call.1} parent=1 // pred_fallthru
      _
    // Predicated region
    $region102: #{tpu_custom_call.1} parent=1 // pred_check
      _
    $region103: #{tpu_custom_call.1} parent=1 // pred_check_branch
      %213 = sbr.rel (0) target = $region105
    $region104: #{tpu_custom_call.1} parent=1 // pred_region
      %215 = dma.done [#allocation12], 16
    $region105: #{tpu_custom_call.1} parent=1 // pred_fallthru
      _
    // Predicated region
    $region106: #{tpu_custom_call.1} parent=1 // pred_check
      _
    $region107: #{tpu_custom_call.1} parent=1 // pred_check_branch
      %217 = sbr.rel (0) target = $region109
    $region108: #{tpu_custom_call.1} parent=1 // pred_region
      %219 = dma.done [#allocation12], 16
    $region109: #{tpu_custom_call.1} parent=1 // pred_fallthru
      _
    // Predicated region
    $region110: #{tpu_custom_call.1} parent=1 // pred_check
      _
    $region111: #{tpu_custom_call.1} parent=1 // pred_check_branch
      %221 = sbr.rel (0) target = $region113
    $region112: #{tpu_custom_call.1} parent=1 // pred_region
      %223 = dma.done [#allocation15], 16
    $region113: #{tpu_custom_call.1} parent=1 // pred_fallthru
      _
    // Predicated region
    $region114: #{tpu_custom_call.1} parent=1 // pred_check
      _
    $region115: #{tpu_custom_call.1} parent=1 // pred_check_branch
      %225 = sbr.rel (0) target = $region117
    $region116: #{tpu_custom_call.1} parent=1 // pred_region
      %227 = dma.done [#allocation15], 16
    $region117: #{tpu_custom_call.1} parent=1 // pred_fallthru
      _
    // Predicated region
    $region118: #{tpu_custom_call.1} parent=1 // pred_check
      _
    $region119: #{tpu_custom_call.1} parent=1 // pred_check_branch
      %229 = sbr.rel (0) target = $region121
    $region120: #{tpu_custom_call.1} parent=1 // pred_region
      %231 = dma.done [#allocation18], 16
    $region121: #{tpu_custom_call.1} parent=1 // pred_fallthru
      _
    // Predicated region
    $region122: #{tpu_custom_call.1} parent=1 // pred_check
      _
    $region123: #{tpu_custom_call.1} parent=1 // pred_check_branch
      %233 = sbr.rel (0) target = $region125
    $region124: #{tpu_custom_call.1} parent=1 // pred_region
      %235 = dma.done [#allocation18], 16
    $region125: #{tpu_custom_call.1} parent=1 // pred_fallthru
      _
    // Predicated region
    $region126: #{tpu_custom_call.1} parent=1 // pred_check
      _
    $region127: #{tpu_custom_call.1} parent=1 // pred_check_branch
      %237 = sbr.rel (0) target = $region129
    $region128: #{tpu_custom_call.1} parent=1 // pred_region
      %239 = dma.done [#allocation21], 16
    $region129: #{tpu_custom_call.1} parent=1 // pred_fallthru
      _
    // Predicated region
    $region130: #{tpu_custom_call.1} parent=1 // pred_check
      _
    $region131: #{tpu_custom_call.1} parent=1 // pred_check_branch
      %241 = sbr.rel (0) target = $region133
    $region132: #{tpu_custom_call.1} parent=1 // pred_region
      %243 = dma.done [#allocation21], 16
    $region133: #{tpu_custom_call.1} parent=1 // pred_fallthru
      _
    %v245 = vld [vmem:[#allocation2] sm:$0xff]
    %v246 = vld [vmem:[#allocation2 + $0x8] sm:$0xff]
    %v247 = vld [vmem:[#allocation2 + $0x10] sm:$0xff]
    %v248 = vld [vmem:[#allocation2 + $0x18] sm:$0xff]
    %v249 = vld [vmem:[#allocation2 + $0x20] sm:$0xff]
    %v250 = vld [vmem:[#allocation2 + $0x28] sm:$0xff]
    %v251 = vld [vmem:[#allocation2 + $0x30] sm:$0xff]
    %v252 = vld [vmem:[#allocation2 + $0x38] sm:$0xff]
    %v253 = vpack.c.bf16 %v246, %v245
    %v254 = vpack.c.bf16 %v248, %v247
    %v255 = vpack.c.bf16 %v250, %v249
    %v256 = vpack.c.bf16 %v252, %v251
    %v257 = vld [vmem:[%s1] sm:$0xf]
    %v258 = vld [vmem:[%s1 + $0x4] sm:$0xf]
    %v259 = vld [vmem:[%s1 + $0x8] sm:$0xf]
    %v260 = vld [vmem:[%s1 + $0xc] sm:$0xf]
    %v261 = vld [vmem:[%s1 + $0x10] sm:$0xf]
    %v262 = vld [vmem:[%s1 + $0x14] sm:$0xf]
    %v263 = vld [vmem:[%s1 + $0x18] sm:$0xf]
    %v264 = vld [vmem:[%s1 + $0x1c] sm:$0xf]
    %v265 = vld [vmem:[#allocation5] sm:$0x1]
    %v267 = vperm.slane %v265, 0
    %v277 = vunpack.c.l.b16 %v257
    %v278 = vunpack.c.l.b16 %v258
    %v279 = vunpack.c.l.b16 %v259
    %v280 = vunpack.c.l.b16 %v260
    %v281 = vunpack.c.l.b16 %v261
    %v282 = vunpack.c.l.b16 %v262
    %v283 = vunpack.c.l.b16 %v263
    %v284 = vunpack.c.l.b16 %v264
    %v285 = vpack.c.b16 %v278, %v277
    %v286 = vpack.c.b16 %v280, %v279
    %v287 = vpack.c.b16 %v282, %v281
    %v288 = vpack.c.b16 %v284, %v283
    %vm293 = vcmask 523264
    %v295 = vsel %vm293, %v253, 0
    %v298 = vsel %vm293, %v254, 0
    %v301 = vsel %vm293, %v255, 0
    %v304 = vsel %vm293, %v256, 0
    %306 = vmatpush.bf16.msra.mxu0 0
    %307 = vmatpush.bf16.msra.mxu0 0
    %308 = vmatpush.bf16.msra.mxu0 0
    %309 = vmatpush.bf16.msra.mxu0 0
    %310 = vmatpush.bf16.msra.mxu0 %v288
    %311 = vmatpush.bf16.msra.mxu0 %v287
    %312 = vmatpush.bf16.msra.mxu0 %v286
    %313 = vmatpush.bf16.msra.mxu0 %v285
    %314 = vmatmul.bf16.gmra.mxu0 %v295
    %v315 = vpop.f32.mrf.mxu0
    %v316 = vadd.f32 %v267, %v315
    %v317 = vpop.f32.mrf.mxu0
    %v318 = vadd.f32 %v267, %v317
    %319 = vmatmul.bf16.gmra.mxu0 %v298
    %v320 = vpop.f32.mrf.mxu0
    %v321 = vadd.f32 %v267, %v320
    %v322 = vpop.f32.mrf.mxu0
    %v323 = vadd.f32 %v267, %v322
    %324 = vmatmul.bf16.gmra.mxu0 %v301
    %v325 = vpop.f32.mrf.mxu0
    %v326 = vadd.f32 %v267, %v325
    %v327 = vpop.f32.mrf.mxu0
    %v328 = vadd.f32 %v267, %v327
    %329 = vmatmul.bf16.gmra.mxu0 %v304
    %v330 = vpop.f32.mrf.mxu0
    %v331 = vadd.f32 %v267, %v330
    %v332 = vpop.f32.mrf.mxu0
    %v333 = vadd.f32 %v267, %v332
    %334 = vdwg.mxu0
    %v335 = vld [vmem:[#allocation7] sm:$0x1]
    %v336 = vld [vmem:[#allocation8] sm:$0x1]
    %v337 = vsel %vm293, %v316, 0.0
    %338 = vadd.xlane.f32.xlu0 %v337
    %v339 = vpop.xlane.xlu0 %338
    %v340 = vsel %vm293, %v318, 0.0
    %341 = vadd.xlane.f32.xlu0 %v340
    %v342 = vpop.xlane.xlu0 %341
    %v343 = vsel %vm293, %v321, 0.0
    %344 = vadd.xlane.f32.xlu0 %v343
    %v345 = vpop.xlane.xlu0 %344
    %v346 = vsel %vm293, %v323, 0.0
    %347 = vadd.xlane.f32.xlu0 %v346
    %v348 = vpop.xlane.xlu0 %347
    %v349 = vsel %vm293, %v326, 0.0
    %350 = vadd.xlane.f32.xlu0 %v349
    %v351 = vpop.xlane.xlu0 %350
    %v352 = vsel %vm293, %v328, 0.0
    %353 = vadd.xlane.f32.xlu0 %v352
    %v354 = vpop.xlane.xlu0 %353
    %v355 = vsel %vm293, %v331, 0.0
    %356 = vadd.xlane.f32.xlu0 %v355
    %v357 = vpop.xlane.xlu0 %356
    %v358 = vsel %vm293, %v333, 0.0
    %359 = vadd.xlane.f32.xlu0 %v358
    %v360 = vpop.xlane.xlu0 %359
    %v361 = vrcp.pop 64.0
    %v362 = vmul.f32 64.0, %v361
    %v363 = vsub.f32 1.0, %v362
    %v364 = vmul.f32 %v361, %v363
    %v365 = vadd.f32 %v361, %v364
    %vm366 = vweird.f32 %v361
    %v367 = vsel %vm366, %v361, %v365
    %v368 = vmul.f32 %v339, %v367
    %v369 = vmul.f32 %v342, %v367
    %v370 = vmul.f32 %v345, %v367
    %v371 = vmul.f32 %v348, %v367
    %v372 = vmul.f32 %v351, %v367
    %v373 = vmul.f32 %v354, %v367
    %v374 = vmul.f32 %v357, %v367
    %v375 = vmul.f32 %v360, %v367
    %v376 = vmul.f32 %v316, %v316
    %v377 = vmul.f32 %v318, %v318
    %v378 = vmul.f32 %v321, %v321
    %v379 = vmul.f32 %v323, %v323
    %v380 = vmul.f32 %v326, %v326
    %v381 = vmul.f32 %v328, %v328
    %v382 = vmul.f32 %v331, %v331
    %v383 = vmul.f32 %v333, %v333
    %v384 = vsel %vm293, %v376, 0.0
    %385 = vadd.xlane.f32.xlu0 %v384
    %v386 = vpop.xlane.xlu0 %385
    %v387 = vsel %vm293, %v377, 0.0
    %388 = vadd.xlane.f32.xlu0 %v387
    %v389 = vpop.xlane.xlu0 %388
    %v390 = vsel %vm293, %v378, 0.0
    %391 = vadd.xlane.f32.xlu0 %v390
    %v392 = vpop.xlane.xlu0 %391
    %v393 = vsel %vm293, %v379, 0.0
    %394 = vadd.xlane.f32.xlu0 %v393
    %v395 = vpop.xlane.xlu0 %394
    %v396 = vsel %vm293, %v380, 0.0
    %397 = vadd.xlane.f32.xlu0 %v396
    %v398 = vpop.xlane.xlu0 %397
    %v399 = vsel %vm293, %v381, 0.0
    %400 = vadd.xlane.f32.xlu0 %v399
    %v401 = vpop.xlane.xlu0 %400
    %v402 = vsel %vm293, %v382, 0.0
    %403 = vadd.xlane.f32.xlu0 %v402
    %v404 = vpop.xlane.xlu0 %403
    %v405 = vsel %vm293, %v383, 0.0
    %406 = vadd.xlane.f32.xlu0 %v405
    %v407 = vpop.xlane.xlu0 %406
    %v408 = vmul.f32 %v386, %v367
    %v409 = vmul.f32 %v389, %v367
    %v410 = vmul.f32 %v392, %v367
    %v411 = vmul.f32 %v395, %v367
    %v412 = vmul.f32 %v398, %v367
    %v413 = vmul.f32 %v401, %v367
    %v414 = vmul.f32 %v404, %v367
    %v415 = vmul.f32 %v407, %v367
    %v416 = vmul.f32 %v368, %v368
    %v417 = vmul.f32 %v369, %v369
    %v418 = vmul.f32 %v370, %v370
    %v419 = vmul.f32 %v371, %v371
    %v420 = vmul.f32 %v372, %v372
    %v421 = vmul.f32 %v373, %v373
    %v422 = vmul.f32 %v374, %v374
    %v423 = vmul.f32 %v375, %v375
    %v424 = vsub.f32 %v408, %v416
    %v425 = vsub.f32 %v409, %v417
    %v426 = vsub.f32 %v410, %v418
    %v427 = vsub.f32 %v411, %v419
    %v428 = vsub.f32 %v412, %v420
    %v429 = vsub.f32 %v413, %v421
    %v430 = vsub.f32 %v414, %v422
    %v431 = vsub.f32 %v415, %v423
    %v432 = vmax.f32 %v424, 0.0
    %v433 = vmax.f32 %v425, 0.0
    %v434 = vmax.f32 %v426, 0.0
    %v435 = vmax.f32 %v427, 0.0
    %v436 = vmax.f32 %v428, 0.0
    %v437 = vmax.f32 %v429, 0.0
    %v438 = vmax.f32 %v430, 0.0
    %v439 = vmax.f32 %v431, 0.0
    %v440 = vsub.f32 %v316, %v368
    %v441 = vsub.f32 %v318, %v369
    %v442 = vsub.f32 %v321, %v370
    %v443 = vsub.f32 %v323, %v371
    %v444 = vsub.f32 %v326, %v372
    %v445 = vsub.f32 %v328, %v373
    %v446 = vsub.f32 %v331, %v374
    %v447 = vsub.f32 %v333, %v375
    %v448 = vadd.f32 %v432, 1e-05
    %v449 = vadd.f32 %v433, 1e-05
    %v450 = vadd.f32 %v434, 1e-05
    %v451 = vadd.f32 %v435, 1e-05
    %v452 = vadd.f32 %v436, 1e-05
    %v453 = vadd.f32 %v437, 1e-05
    %v454 = vadd.f32 %v438, 1e-05
    %v455 = vadd.f32 %v439, 1e-05
    %v456 = vrsqrt.pop %v448
    %v457 = vmul.f32 %v456, %v448
    %v458 = vmul.f32 %v457, %v456
    %v459 = vmul.f32 0.5, %v458
    %v460 = vsub.f32 1.5, %v459
    %v461 = vmul.f32 %v456, %v460
    %vm462 = vweird.f32 %v448
    %vm463 = vweird.f32 %v456
    %vm464 = vmor %vm462, %vm463
    %v465 = vsel %vm464, %v456, %v461
    %v466 = vrsqrt.pop %v449
    %v467 = vmul.f32 %v466, %v449
    %v468 = vmul.f32 %v467, %v466
    %v469 = vmul.f32 0.5, %v468
    %v470 = vsub.f32 1.5, %v469
    %v471 = vmul.f32 %v466, %v470
    %vm472 = vweird.f32 %v449
    %vm473 = vweird.f32 %v466
    %vm474 = vmor %vm472, %vm473
    %v475 = vsel %vm474, %v466, %v471
    %v476 = vrsqrt.pop %v450
    %v477 = vmul.f32 %v476, %v450
    %v478 = vmul.f32 %v477, %v476
    %v479 = vmul.f32 0.5, %v478
    %v480 = vsub.f32 1.5, %v479
    %v481 = vmul.f32 %v476, %v480
    %vm482 = vweird.f32 %v450
    %vm483 = vweird.f32 %v476
    %vm484 = vmor %vm482, %vm483
    %v485 = vsel %vm484, %v476, %v481
    %v486 = vrsqrt.pop %v451
    %v487 = vmul.f32 %v486, %v451
    %v488 = vmul.f32 %v487, %v486
    %v489 = vmul.f32 0.5, %v488
    %v490 = vsub.f32 1.5, %v489
    %v491 = vmul.f32 %v486, %v490
    %vm492 = vweird.f32 %v451
    %vm493 = vweird.f32 %v486
    %vm494 = vmor %vm492, %vm493
    %v495 = vsel %vm494, %v486, %v491
    %v496 = vrsqrt.pop %v452
    %v497 = vmul.f32 %v496, %v452
    %v498 = vmul.f32 %v497, %v496
    %v499 = vmul.f32 0.5, %v498
    %v500 = vsub.f32 1.5, %v499
    %v501 = vmul.f32 %v496, %v500
    %vm502 = vweird.f32 %v452
    %vm503 = vweird.f32 %v496
    %vm504 = vmor %vm502, %vm503
    %v505 = vsel %vm504, %v496, %v501
    %v506 = vrsqrt.pop %v453
    %v507 = vmul.f32 %v506, %v453
    %v508 = vmul.f32 %v507, %v506
    %v509 = vmul.f32 0.5, %v508
    %v510 = vsub.f32 1.5, %v509
    %v511 = vmul.f32 %v506, %v510
    %vm512 = vweird.f32 %v453
    %vm513 = vweird.f32 %v506
    %vm514 = vmor %vm512, %vm513
    %v515 = vsel %vm514, %v506, %v511
    %v516 = vrsqrt.pop %v454
    %v517 = vmul.f32 %v516, %v454
    %v518 = vmul.f32 %v517, %v516
    %v519 = vmul.f32 0.5, %v518
    %v520 = vsub.f32 1.5, %v519
    %v521 = vmul.f32 %v516, %v520
    %vm522 = vweird.f32 %v454
    %vm523 = vweird.f32 %v516
    %vm524 = vmor %vm522, %vm523
    %v525 = vsel %vm524, %v516, %v521
    %v526 = vrsqrt.pop %v455
    %v527 = vmul.f32 %v526, %v455
    %v528 = vmul.f32 %v527, %v526
    %v529 = vmul.f32 0.5, %v528
    %v530 = vsub.f32 1.5, %v529
    %v531 = vmul.f32 %v526, %v530
    %vm532 = vweird.f32 %v455
    %vm533 = vweird.f32 %v526
    %vm534 = vmor %vm532, %vm533
    %v535 = vsel %vm534, %v526, %v531
    %v536 = vmul.f32 %v440, %v465
    %v537 = vmul.f32 %v441, %v475
    %v538 = vmul.f32 %v442, %v485
    %v539 = vmul.f32 %v443, %v495
    %v540 = vmul.f32 %v444, %v505
    %v541 = vmul.f32 %v445, %v515
    %v542 = vmul.f32 %v446, %v525
    %v543 = vmul.f32 %v447, %v535
    %v545 = vperm.slane %v335, 0
    %v547 = vmul.f32 %v536, %v545
    %v548 = vmul.f32 %v537, %v545
    %v549 = vmul.f32 %v538, %v545
    %v550 = vmul.f32 %v539, %v545
    %v551 = vmul.f32 %v540, %v545
    %v552 = vmul.f32 %v541, %v545
    %v553 = vmul.f32 %v542, %v545
    %v554 = vmul.f32 %v543, %v545
    %v556 = vperm.slane %v336, 0
    %v558 = vadd.f32 %v547, %v556
    %v559 = vadd.f32 %v548, %v556
    %v560 = vadd.f32 %v549, %v556
    %v561 = vadd.f32 %v550, %v556
    %v562 = vadd.f32 %v551, %v556
    %v563 = vadd.f32 %v552, %v556
    %v564 = vadd.f32 %v553, %v556
    %v565 = vadd.f32 %v554, %v556
    %v566 = vmax.f32 %v558, 0.0
    %v567 = vmax.f32 %v559, 0.0
    %v568 = vmax.f32 %v560, 0.0
    %v569 = vmax.f32 %v561, 0.0
    %v570 = vmax.f32 %v562, 0.0
    %v571 = vmax.f32 %v563, 0.0
    %v572 = vmax.f32 %v564, 0.0
    %v573 = vmax.f32 %v565, 0.0
    %v574 = vpack.c.bf16 %v567, %v566
    %v575 = vpack.c.bf16 %v569, %v568
    %v576 = vpack.c.bf16 %v571, %v570
    %v577 = vpack.c.bf16 %v573, %v572
    %v578 = vld [vmem:[%s5] sm:$0xf]
    %v579 = vld [vmem:[%s5 + $0x4] sm:$0xf]
    %v580 = vld [vmem:[%s5 + $0x8] sm:$0xf]
    %v581 = vld [vmem:[%s5 + $0xc] sm:$0xf]
    %v582 = vld [vmem:[%s5 + $0x10] sm:$0xf]
    %v583 = vld [vmem:[%s5 + $0x14] sm:$0xf]
    %v584 = vld [vmem:[%s5 + $0x18] sm:$0xf]
    %v585 = vld [vmem:[%s5 + $0x1c] sm:$0xf]
    %v586 = vld [vmem:[#allocation10] sm:$0x1]
    %v588 = vperm.slane %v586, 0
    %v598 = vunpack.c.l.b16 %v578
    %v599 = vunpack.c.l.b16 %v579
    %v600 = vunpack.c.l.b16 %v580
    %v601 = vunpack.c.l.b16 %v581
    %v602 = vunpack.c.l.b16 %v582
    %v603 = vunpack.c.l.b16 %v583
    %v604 = vunpack.c.l.b16 %v584
    %v605 = vunpack.c.l.b16 %v585
    %v606 = vpack.c.b16 %v599, %v598
    %v607 = vpack.c.b16 %v601, %v600
    %v608 = vpack.c.b16 %v603, %v602
    %v609 = vpack.c.b16 %v605, %v604
    %v615 = vsel %vm293, %v574, 0
    %v618 = vsel %vm293, %v575, 0
    %v621 = vsel %vm293, %v576, 0
    %v624 = vsel %vm293, %v577, 0
    %626 = vmatpush.bf16.msra.mxu0 0
    %627 = vmatpush.bf16.msra.mxu0 0
    %628 = vmatpush.bf16.msra.mxu0 0
    %629 = vmatpush.bf16.msra.mxu0 0
    %630 = vmatpush.bf16.msra.mxu0 %v609
    %631 = vmatpush.bf16.msra.mxu0 %v608
    %632 = vmatpush.bf16.msra.mxu0 %v607
    %633 = vmatpush.bf16.msra.mxu0 %v606
    %634 = vmatmul.bf16.gmra.mxu0 %v615
    %v635 = vpop.f32.mrf.mxu0
    %v636 = vadd.f32 %v588, %v635
    %v637 = vpop.f32.mrf.mxu0
    %v638 = vadd.f32 %v588, %v637
    %639 = vmatmul.bf16.gmra.mxu0 %v618
    %v640 = vpop.f32.mrf.mxu0
    %v641 = vadd.f32 %v588, %v640
    %v642 = vpop.f32.mrf.mxu0
    %v643 = vadd.f32 %v588, %v642
    %644 = vmatmul.bf16.gmra.mxu0 %v621
    %v645 = vpop.f32.mrf.mxu0
    %v646 = vadd.f32 %v588, %v645
    %v647 = vpop.f32.mrf.mxu0
    %v648 = vadd.f32 %v588, %v647
    %649 = vmatmul.bf16.gmra.mxu0 %v624
    %v650 = vpop.f32.mrf.mxu0
    %v651 = vadd.f32 %v588, %v650
    %v652 = vpop.f32.mrf.mxu0
    %v653 = vadd.f32 %v588, %v652
    %654 = vdwg.mxu0
    %v655 = vld [vmem:[#allocation11] sm:$0x1]
    %v656 = vld [vmem:[#allocation13] sm:$0x1]
    %665 = vrot.lane.b32.xlu0 %v316, 64
    %v666 = vpop.permute.xlu0 %665
    %667 = vrot.lane.b32.xlu0 %v318, 64
    %v668 = vpop.permute.xlu0 %667
    %669 = vrot.lane.b32.xlu0 %v321, 64
    %v670 = vpop.permute.xlu0 %669
    %671 = vrot.lane.b32.xlu0 %v323, 64
    %v672 = vpop.permute.xlu0 %671
    %673 = vrot.lane.b32.xlu0 %v326, 64
    %v674 = vpop.permute.xlu0 %673
    %675 = vrot.lane.b32.xlu0 %v328, 64
    %v676 = vpop.permute.xlu0 %675
    %677 = vrot.lane.b32.xlu0 %v331, 64
    %v678 = vpop.permute.xlu0 %677
    %679 = vrot.lane.b32.xlu0 %v333, 64
    %v680 = vpop.permute.xlu0 %679
    %vm689 = vcmask 130048
    %v690 = vsel %vm689, %v666, 0.0
    %691 = vadd.xlane.f32.xlu0 %v690
    %v692 = vpop.xlane.xlu0 %691
    %v693 = vsel %vm689, %v668, 0.0
    %694 = vadd.xlane.f32.xlu0 %v693
    %v695 = vpop.xlane.xlu0 %694
    %v696 = vsel %vm689, %v670, 0.0
    %697 = vadd.xlane.f32.xlu0 %v696
    %v698 = vpop.xlane.xlu0 %697
    %v699 = vsel %vm689, %v672, 0.0
    %700 = vadd.xlane.f32.xlu0 %v699
    %v701 = vpop.xlane.xlu0 %700
    %v702 = vsel %vm689, %v674, 0.0
    %703 = vadd.xlane.f32.xlu0 %v702
    %v704 = vpop.xlane.xlu0 %703
    %v705 = vsel %vm689, %v676, 0.0
    %706 = vadd.xlane.f32.xlu0 %v705
    %v707 = vpop.xlane.xlu0 %706
    %v708 = vsel %vm689, %v678, 0.0
    %709 = vadd.xlane.f32.xlu0 %v708
    %v710 = vpop.xlane.xlu0 %709
    %v711 = vsel %vm689, %v680, 0.0
    %712 = vadd.xlane.f32.xlu0 %v711
    %v713 = vpop.xlane.xlu0 %712
    %v714 = vrcp.pop 16.0
    %v715 = vmul.f32 16.0, %v714
    %v716 = vsub.f32 1.0, %v715
    %v717 = vmul.f32 %v714, %v716
    %v718 = vadd.f32 %v714, %v717
    %vm719 = vweird.f32 %v714
    %v720 = vsel %vm719, %v714, %v718
    %v721 = vmul.f32 %v692, %v720
    %v722 = vmul.f32 %v695, %v720
    %v723 = vmul.f32 %v698, %v720
    %v724 = vmul.f32 %v701, %v720
    %v725 = vmul.f32 %v704, %v720
    %v726 = vmul.f32 %v707, %v720
    %v727 = vmul.f32 %v710, %v720
    %v728 = vmul.f32 %v713, %v720
    %737 = vrot.lane.b32.xlu0 %v376, 64
    %v738 = vpop.permute.xlu0 %737
    %739 = vrot.lane.b32.xlu0 %v377, 64
    %v740 = vpop.permute.xlu0 %739
    %741 = vrot.lane.b32.xlu0 %v378, 64
    %v742 = vpop.permute.xlu0 %741
    %743 = vrot.lane.b32.xlu0 %v379, 64
    %v744 = vpop.permute.xlu0 %743
    %745 = vrot.lane.b32.xlu0 %v380, 64
    %v746 = vpop.permute.xlu0 %745
    %747 = vrot.lane.b32.xlu0 %v381, 64
    %v748 = vpop.permute.xlu0 %747
    %749 = vrot.lane.b32.xlu0 %v382, 64
    %v750 = vpop.permute.xlu0 %749
    %751 = vrot.lane.b32.xlu0 %v383, 64
    %v752 = vpop.permute.xlu0 %751
    %v761 = vsel %vm689, %v738, 0.0
    %762 = vadd.xlane.f32.xlu0 %v761
    %v763 = vpop.xlane.xlu0 %762
    %v764 = vsel %vm689, %v740, 0.0
    %765 = vadd.xlane.f32.xlu0 %v764
    %v766 = vpop.xlane.xlu0 %765
    %v767 = vsel %vm689, %v742, 0.0
    %768 = vadd.xlane.f32.xlu0 %v767
    %v769 = vpop.xlane.xlu0 %768
    %v770 = vsel %vm689, %v744, 0.0
    %771 = vadd.xlane.f32.xlu0 %v770
    %v772 = vpop.xlane.xlu0 %771
    %v773 = vsel %vm689, %v746, 0.0
    %774 = vadd.xlane.f32.xlu0 %v773
    %v775 = vpop.xlane.xlu0 %774
    %v776 = vsel %vm689, %v748, 0.0
    %777 = vadd.xlane.f32.xlu0 %v776
    %v778 = vpop.xlane.xlu0 %777
    %v779 = vsel %vm689, %v750, 0.0
    %780 = vadd.xlane.f32.xlu0 %v779
    %v781 = vpop.xlane.xlu0 %780
    %v782 = vsel %vm689, %v752, 0.0
    %783 = vadd.xlane.f32.xlu0 %v782
    %v784 = vpop.xlane.xlu0 %783
    %v785 = vmul.f32 %v763, %v720
    %v786 = vmul.f32 %v766, %v720
    %v787 = vmul.f32 %v769, %v720
    %v788 = vmul.f32 %v772, %v720
    %v789 = vmul.f32 %v775, %v720
    %v790 = vmul.f32 %v778, %v720
    %v791 = vmul.f32 %v781, %v720
    %v792 = vmul.f32 %v784, %v720
    %v793 = vmul.f32 %v721, %v721
    %v794 = vmul.f32 %v722, %v722
    %v795 = vmul.f32 %v723, %v723
    %v796 = vmul.f32 %v724, %v724
    %v797 = vmul.f32 %v725, %v725
    %v798 = vmul.f32 %v726, %v726
    %v799 = vmul.f32 %v727, %v727
    %v800 = vmul.f32 %v728, %v728
    %v801 = vsub.f32 %v785, %v793
    %v802 = vsub.f32 %v786, %v794
    %v803 = vsub.f32 %v787, %v795
    %v804 = vsub.f32 %v788, %v796
    %v805 = vsub.f32 %v789, %v797
    %v806 = vsub.f32 %v790, %v798
    %v807 = vsub.f32 %v791, %v799
    %v808 = vsub.f32 %v792, %v800
    %v809 = vmax.f32 %v801, 0.0
    %v810 = vmax.f32 %v802, 0.0
    %v811 = vmax.f32 %v803, 0.0
    %v812 = vmax.f32 %v804, 0.0
    %v813 = vmax.f32 %v805, 0.0
    %v814 = vmax.f32 %v806, 0.0
    %v815 = vmax.f32 %v807, 0.0
    %v816 = vmax.f32 %v808, 0.0
    %v817 = vsub.f32 %v316, %v721
    %v818 = vsub.f32 %v318, %v722
    %v819 = vsub.f32 %v321, %v723
    %v820 = vsub.f32 %v323, %v724
    %v821 = vsub.f32 %v326, %v725
    %v822 = vsub.f32 %v328, %v726
    %v823 = vsub.f32 %v331, %v727
    %v824 = vsub.f32 %v333, %v728
    %v825 = vadd.f32 %v809, 1e-05
    %v826 = vadd.f32 %v810, 1e-05
    %v827 = vadd.f32 %v811, 1e-05
    %v828 = vadd.f32 %v812, 1e-05
    %v829 = vadd.f32 %v813, 1e-05
    %v830 = vadd.f32 %v814, 1e-05
    %v831 = vadd.f32 %v815, 1e-05
    %v832 = vadd.f32 %v816, 1e-05
    %v833 = vrsqrt.pop %v825
    %v834 = vmul.f32 %v833, %v825
    %v835 = vmul.f32 %v834, %v833
    %v836 = vmul.f32 0.5, %v835
    %v837 = vsub.f32 1.5, %v836
    %v838 = vmul.f32 %v833, %v837
    %vm839 = vweird.f32 %v825
    %vm840 = vweird.f32 %v833
    %vm841 = vmor %vm839, %vm840
    %v842 = vsel %vm841, %v833, %v838
    %v843 = vrsqrt.pop %v826
    %v844 = vmul.f32 %v843, %v826
    %v845 = vmul.f32 %v844, %v843
    %v846 = vmul.f32 0.5, %v845
    %v847 = vsub.f32 1.5, %v846
    %v848 = vmul.f32 %v843, %v847
    %vm849 = vweird.f32 %v826
    %vm850 = vweird.f32 %v843
    %vm851 = vmor %vm849, %vm850
    %v852 = vsel %vm851, %v843, %v848
    %v853 = vrsqrt.pop %v827
    %v854 = vmul.f32 %v853, %v827
    %v855 = vmul.f32 %v854, %v853
    %v856 = vmul.f32 0.5, %v855
    %v857 = vsub.f32 1.5, %v856
    %v858 = vmul.f32 %v853, %v857
    %vm859 = vweird.f32 %v827
    %vm860 = vweird.f32 %v853
    %vm861 = vmor %vm859, %vm860
    %v862 = vsel %vm861, %v853, %v858
    %v863 = vrsqrt.pop %v828
    %v864 = vmul.f32 %v863, %v828
    %v865 = vmul.f32 %v864, %v863
    %v866 = vmul.f32 0.5, %v865
    %v867 = vsub.f32 1.5, %v866
    %v868 = vmul.f32 %v863, %v867
    %vm869 = vweird.f32 %v828
    %vm870 = vweird.f32 %v863
    %vm871 = vmor %vm869, %vm870
    %v872 = vsel %vm871, %v863, %v868
    %v873 = vrsqrt.pop %v829
    %v874 = vmul.f32 %v873, %v829
    %v875 = vmul.f32 %v874, %v873
    %v876 = vmul.f32 0.5, %v875
    %v877 = vsub.f32 1.5, %v876
    %v878 = vmul.f32 %v873, %v877
    %vm879 = vweird.f32 %v829
    %vm880 = vweird.f32 %v873
    %vm881 = vmor %vm879, %vm880
    %v882 = vsel %vm881, %v873, %v878
    %v883 = vrsqrt.pop %v830
    %v884 = vmul.f32 %v883, %v830
    %v885 = vmul.f32 %v884, %v883
    %v886 = vmul.f32 0.5, %v885
    %v887 = vsub.f32 1.5, %v886
    %v888 = vmul.f32 %v883, %v887
    %vm889 = vweird.f32 %v830
    %vm890 = vweird.f32 %v883
    %vm891 = vmor %vm889, %vm890
    %v892 = vsel %vm891, %v883, %v888
    %v893 = vrsqrt.pop %v831
    %v894 = vmul.f32 %v893, %v831
    %v895 = vmul.f32 %v894, %v893
    %v896 = vmul.f32 0.5, %v895
    %v897 = vsub.f32 1.5, %v896
    %v898 = vmul.f32 %v893, %v897
    %vm899 = vweird.f32 %v831
    %vm900 = vweird.f32 %v893
    %vm901 = vmor %vm899, %vm900
    %v902 = vsel %vm901, %v893, %v898
    %v903 = vrsqrt.pop %v832
    %v904 = vmul.f32 %v903, %v832
    %v905 = vmul.f32 %v904, %v903
    %v906 = vmul.f32 0.5, %v905
    %v907 = vsub.f32 1.5, %v906
    %v908 = vmul.f32 %v903, %v907
    %vm909 = vweird.f32 %v832
    %vm910 = vweird.f32 %v903
    %vm911 = vmor %vm909, %vm910
    %v912 = vsel %vm911, %v903, %v908
    %v913 = vmul.f32 %v817, %v842
    %v914 = vmul.f32 %v818, %v852
    %v915 = vmul.f32 %v819, %v862
    %v916 = vmul.f32 %v820, %v872
    %v917 = vmul.f32 %v821, %v882
    %v918 = vmul.f32 %v822, %v892
    %v919 = vmul.f32 %v823, %v902
    %v920 = vmul.f32 %v824, %v912
    %v922 = vperm.slane %v655, 0
    %923 = vrot.lane.b32.xlu0 %v922, 64
    %v924 = vpop.permute.xlu0 %923
    %v926 = vmul.f32 %v913, %v924
    %v927 = vmul.f32 %v914, %v924
    %v928 = vmul.f32 %v915, %v924
    %v929 = vmul.f32 %v916, %v924
    %v930 = vmul.f32 %v917, %v924
    %v931 = vmul.f32 %v918, %v924
    %v932 = vmul.f32 %v919, %v924
    %v933 = vmul.f32 %v920, %v924
    %v935 = vperm.slane %v656, 0
    %936 = vrot.lane.b32.xlu0 %v935, 64
    %v937 = vpop.permute.xlu0 %936
    %v939 = vadd.f32 %v926, %v937
    %v940 = vadd.f32 %v927, %v937
    %v941 = vadd.f32 %v928, %v937
    %v942 = vadd.f32 %v929, %v937
    %v943 = vadd.f32 %v930, %v937
    %v944 = vadd.f32 %v931, %v937
    %v945 = vadd.f32 %v932, %v937
    %v946 = vadd.f32 %v933, %v937
    %v947 = vmax.f32 %v939, 0.0
    %v948 = vmax.f32 %v940, 0.0
    %v949 = vmax.f32 %v941, 0.0
    %v950 = vmax.f32 %v942, 0.0
    %v951 = vmax.f32 %v943, 0.0
    %v952 = vmax.f32 %v944, 0.0
    %v953 = vmax.f32 %v945, 0.0
    %v954 = vmax.f32 %v946, 0.0
    %v955 = vpack.c.bf16 %v638, %v636
    %v956 = vpack.c.bf16 %v643, %v641
    %v957 = vpack.c.bf16 %v648, %v646
    %v958 = vpack.c.bf16 %v653, %v651
    %v959 = vld [vmem:[%s9] sm:$0xf]
    %v960 = vld [vmem:[%s9 + $0x4] sm:$0xf]
    %v961 = vld [vmem:[%s9 + $0x8] sm:$0xf]
    %v962 = vld [vmem:[%s9 + $0xc] sm:$0xf]
    %v963 = vpack.c.bf16 %v948, %v947
    %v964 = vpack.c.bf16 %v950, %v949
    %v965 = vpack.c.bf16 %v952, %v951
    %v966 = vpack.c.bf16 %v954, %v953
    %v967 = vld [vmem:[%s10] sm:$0xf]
    %v968 = vld [vmem:[%s10 + $0x4] sm:$0xf]
    %973 = vrot.lane.b32.xlu0 %v963, 64
    %v974 = vpop.permute.xlu0 %973
    %975 = vrot.lane.b32.xlu0 %v964, 64
    %v976 = vpop.permute.xlu0 %975
    %977 = vrot.lane.b32.xlu0 %v965, 64
    %v978 = vpop.permute.xlu0 %977
    %979 = vrot.lane.b32.xlu0 %v966, 64
    %v980 = vpop.permute.xlu0 %979
    %v983 = vunpack.c.l.b16 %v967
    %v984 = vunpack.c.l.b16 %v968
    %v985 = vpack.c.b16 %v984, %v983
    %v988 = vsel %vm689, %v974, 0
    %v991 = vsel %vm689, %v976, 0
    %v994 = vsel %vm689, %v978, 0
    %v997 = vsel %vm689, %v980, 0
    %999 = vmatpush.bf16.msra.mxu0 0
    %1000 = vmatpush.bf16.msra.mxu0 0
    %1001 = vmatpush.bf16.msra.mxu0 0
    %1002 = vmatpush.bf16.msra.mxu0 0
    %1003 = vmatpush.bf16.msra.mxu0 0
    %1004 = vmatpush.bf16.msra.mxu0 0
    %1005 = vmatpush.bf16.msra.mxu0 0
    %1006 = vmatpush.bf16.msra.mxu0 %v985
    %1007 = vmatmul.bf16.gmra.mxu0 %v988
    %v1008 = vpop.f32.mrf.mxu0
    %v1009 = vadd.f32 0.0, %v1008
    %v1010 = vpop.f32.mrf.mxu0
    %v1011 = vadd.f32 0.0, %v1010
    %1012 = vmatmul.bf16.gmra.mxu0 %v991
    %v1013 = vpop.f32.mrf.mxu0
    %v1014 = vadd.f32 0.0, %v1013
    %v1015 = vpop.f32.mrf.mxu0
    %v1016 = vadd.f32 0.0, %v1015
    %1017 = vmatmul.bf16.gmra.mxu0 %v994
    %v1018 = vpop.f32.mrf.mxu0
    %v1019 = vadd.f32 0.0, %v1018
    %v1020 = vpop.f32.mrf.mxu0
    %v1021 = vadd.f32 0.0, %v1020
    %1022 = vmatmul.bf16.gmra.mxu0 %v997
    %v1023 = vpop.f32.mrf.mxu0
    %v1024 = vadd.f32 0.0, %v1023
    %v1025 = vpop.f32.mrf.mxu0
    %v1026 = vadd.f32 0.0, %v1025
    %1027 = vdwg.mxu0
    %v1032 = vunpack.c.l.b16 %v959
    %v1033 = vunpack.c.l.b16 %v960
    %v1034 = vunpack.c.l.b16 %v961
    %v1035 = vunpack.c.l.b16 %v962
    %v1036 = vpack.c.b16 %v1033, %v1032
    %v1037 = vpack.c.b16 %v1035, %v1034
    %vm1040 = vcmask 261120
    %v1042 = vsel %vm1040, %v955, 0
    %v1045 = vsel %vm1040, %v956, 0
    %v1048 = vsel %vm1040, %v957, 0
    %v1051 = vsel %vm1040, %v958, 0
    %1053 = vmatpush.bf16.msra.mxu0 0
    %1054 = vmatpush.bf16.msra.mxu0 0
    %1055 = vmatpush.bf16.msra.mxu0 0
    %1056 = vmatpush.bf16.msra.mxu0 0
    %1057 = vmatpush.bf16.msra.mxu0 0
    %1058 = vmatpush.bf16.msra.mxu0 0
    %1059 = vmatpush.bf16.msra.mxu0 %v1037
    %1060 = vmatpush.bf16.msra.mxu0 %v1036
    %1061 = vmatmul.bf16.gmra.mxu0 %v1042
    %v1062 = vpop.f32.mrf.mxu0
    %v1063 = vadd.f32 %v1009, %v1062
    %v1064 = vpop.f32.mrf.mxu0
    %v1065 = vadd.f32 %v1011, %v1064
    %1066 = vmatmul.bf16.gmra.mxu0 %v1045
    %v1067 = vpop.f32.mrf.mxu0
    %v1068 = vadd.f32 %v1014, %v1067
    %v1069 = vpop.f32.mrf.mxu0
    %v1070 = vadd.f32 %v1016, %v1069
    %1071 = vmatmul.bf16.gmra.mxu0 %v1048
    %v1072 = vpop.f32.mrf.mxu0
    %v1073 = vadd.f32 %v1019, %v1072
    %v1074 = vpop.f32.mrf.mxu0
    %v1075 = vadd.f32 %v1021, %v1074
    %1076 = vmatmul.bf16.gmra.mxu0 %v1051
    %v1077 = vpop.f32.mrf.mxu0
    %v1078 = vadd.f32 %v1024, %v1077
    %v1079 = vpop.f32.mrf.mxu0
    %v1080 = vadd.f32 %v1026, %v1079
    %1081 = vdwg.mxu0
    %v1082 = vld [vmem:[#allocation14] sm:$0x1]
    %v1084 = vperm.slane %v1082, 0
    %v1086 = vadd.f32 %v1063, %v1084
    %v1087 = vadd.f32 %v1065, %v1084
    %v1088 = vadd.f32 %v1068, %v1084
    %v1089 = vadd.f32 %v1070, %v1084
    %v1090 = vadd.f32 %v1073, %v1084
    %v1091 = vadd.f32 %v1075, %v1084
    %v1092 = vadd.f32 %v1078, %v1084
    %v1093 = vadd.f32 %v1080, %v1084
    %v1094 = vld [vmem:[#allocation16] sm:$0x1]
    %v1095 = vld [vmem:[#allocation17] sm:$0x1]
    %v1096 = vsel %vm1040, %v1086, 0.0
    %1097 = vadd.xlane.f32.xlu0 %v1096
    %v1098 = vpop.xlane.xlu0 %1097
    %v1099 = vsel %vm1040, %v1087, 0.0
    %1100 = vadd.xlane.f32.xlu0 %v1099
    %v1101 = vpop.xlane.xlu0 %1100
    %v1102 = vsel %vm1040, %v1088, 0.0
    %1103 = vadd.xlane.f32.xlu0 %v1102
    %v1104 = vpop.xlane.xlu0 %1103
    %v1105 = vsel %vm1040, %v1089, 0.0
    %1106 = vadd.xlane.f32.xlu0 %v1105
    %v1107 = vpop.xlane.xlu0 %1106
    %v1108 = vsel %vm1040, %v1090, 0.0
    %1109 = vadd.xlane.f32.xlu0 %v1108
    %v1110 = vpop.xlane.xlu0 %1109
    %v1111 = vsel %vm1040, %v1091, 0.0
    %1112 = vadd.xlane.f32.xlu0 %v1111
    %v1113 = vpop.xlane.xlu0 %1112
    %v1114 = vsel %vm1040, %v1092, 0.0
    %1115 = vadd.xlane.f32.xlu0 %v1114
    %v1116 = vpop.xlane.xlu0 %1115
    %v1117 = vsel %vm1040, %v1093, 0.0
    %1118 = vadd.xlane.f32.xlu0 %v1117
    %v1119 = vpop.xlane.xlu0 %1118
    %v1120 = vrcp.pop 32.0
    %v1121 = vmul.f32 32.0, %v1120
    %v1122 = vsub.f32 1.0, %v1121
    %v1123 = vmul.f32 %v1120, %v1122
    %v1124 = vadd.f32 %v1120, %v1123
    %vm1125 = vweird.f32 %v1120
    %v1126 = vsel %vm1125, %v1120, %v1124
    %v1127 = vmul.f32 %v1098, %v1126
    %v1128 = vmul.f32 %v1101, %v1126
    %v1129 = vmul.f32 %v1104, %v1126
    %v1130 = vmul.f32 %v1107, %v1126
    %v1131 = vmul.f32 %v1110, %v1126
    %v1132 = vmul.f32 %v1113, %v1126
    %v1133 = vmul.f32 %v1116, %v1126
    %v1134 = vmul.f32 %v1119, %v1126
    %v1135 = vmul.f32 %v1086, %v1086
    %v1136 = vmul.f32 %v1087, %v1087
    %v1137 = vmul.f32 %v1088, %v1088
    %v1138 = vmul.f32 %v1089, %v1089
    %v1139 = vmul.f32 %v1090, %v1090
    %v1140 = vmul.f32 %v1091, %v1091
    %v1141 = vmul.f32 %v1092, %v1092
    %v1142 = vmul.f32 %v1093, %v1093
    %v1143 = vsel %vm1040, %v1135, 0.0
    %1144 = vadd.xlane.f32.xlu0 %v1143
    %v1145 = vpop.xlane.xlu0 %1144
    %v1146 = vsel %vm1040, %v1136, 0.0
    %1147 = vadd.xlane.f32.xlu0 %v1146
    %v1148 = vpop.xlane.xlu0 %1147
    %v1149 = vsel %vm1040, %v1137, 0.0
    %1150 = vadd.xlane.f32.xlu0 %v1149
    %v1151 = vpop.xlane.xlu0 %1150
    %v1152 = vsel %vm1040, %v1138, 0.0
    %1153 = vadd.xlane.f32.xlu0 %v1152
    %v1154 = vpop.xlane.xlu0 %1153
    %v1155 = vsel %vm1040, %v1139, 0.0
    %1156 = vadd.xlane.f32.xlu0 %v1155
    %v1157 = vpop.xlane.xlu0 %1156
    %v1158 = vsel %vm1040, %v1140, 0.0
    %1159 = vadd.xlane.f32.xlu0 %v1158
    %v1160 = vpop.xlane.xlu0 %1159
    %v1161 = vsel %vm1040, %v1141, 0.0
    %1162 = vadd.xlane.f32.xlu0 %v1161
    %v1163 = vpop.xlane.xlu0 %1162
    %v1164 = vsel %vm1040, %v1142, 0.0
    %1165 = vadd.xlane.f32.xlu0 %v1164
    %v1166 = vpop.xlane.xlu0 %1165
    %v1167 = vmul.f32 %v1145, %v1126
    %v1168 = vmul.f32 %v1148, %v1126
    %v1169 = vmul.f32 %v1151, %v1126
    %v1170 = vmul.f32 %v1154, %v1126
    %v1171 = vmul.f32 %v1157, %v1126
    %v1172 = vmul.f32 %v1160, %v1126
    %v1173 = vmul.f32 %v1163, %v1126
    %v1174 = vmul.f32 %v1166, %v1126
    %v1175 = vmul.f32 %v1127, %v1127
    %v1176 = vmul.f32 %v1128, %v1128
    %v1177 = vmul.f32 %v1129, %v1129
    %v1178 = vmul.f32 %v1130, %v1130
    %v1179 = vmul.f32 %v1131, %v1131
    %v1180 = vmul.f32 %v1132, %v1132
    %v1181 = vmul.f32 %v1133, %v1133
    %v1182 = vmul.f32 %v1134, %v1134
    %v1183 = vsub.f32 %v1167, %v1175
    %v1184 = vsub.f32 %v1168, %v1176
    %v1185 = vsub.f32 %v1169, %v1177
    %v1186 = vsub.f32 %v1170, %v1178
    %v1187 = vsub.f32 %v1171, %v1179
    %v1188 = vsub.f32 %v1172, %v1180
    %v1189 = vsub.f32 %v1173, %v1181
    %v1190 = vsub.f32 %v1174, %v1182
    %v1191 = vmax.f32 %v1183, 0.0
    %v1192 = vmax.f32 %v1184, 0.0
    %v1193 = vmax.f32 %v1185, 0.0
    %v1194 = vmax.f32 %v1186, 0.0
    %v1195 = vmax.f32 %v1187, 0.0
    %v1196 = vmax.f32 %v1188, 0.0
    %v1197 = vmax.f32 %v1189, 0.0
    %v1198 = vmax.f32 %v1190, 0.0
    %v1199 = vsub.f32 %v1086, %v1127
    %v1200 = vsub.f32 %v1087, %v1128
    %v1201 = vsub.f32 %v1088, %v1129
    %v1202 = vsub.f32 %v1089, %v1130
    %v1203 = vsub.f32 %v1090, %v1131
    %v1204 = vsub.f32 %v1091, %v1132
    %v1205 = vsub.f32 %v1092, %v1133
    %v1206 = vsub.f32 %v1093, %v1134
    %v1207 = vadd.f32 %v1191, 1e-05
    %v1208 = vadd.f32 %v1192, 1e-05
    %v1209 = vadd.f32 %v1193, 1e-05
    %v1210 = vadd.f32 %v1194, 1e-05
    %v1211 = vadd.f32 %v1195, 1e-05
    %v1212 = vadd.f32 %v1196, 1e-05
    %v1213 = vadd.f32 %v1197, 1e-05
    %v1214 = vadd.f32 %v1198, 1e-05
    %v1215 = vrsqrt.pop %v1207
    %v1216 = vmul.f32 %v1215, %v1207
    %v1217 = vmul.f32 %v1216, %v1215
    %v1218 = vmul.f32 0.5, %v1217
    %v1219 = vsub.f32 1.5, %v1218
    %v1220 = vmul.f32 %v1215, %v1219
    %vm1221 = vweird.f32 %v1207
    %vm1222 = vweird.f32 %v1215
    %vm1223 = vmor %vm1221, %vm1222
    %v1224 = vsel %vm1223, %v1215, %v1220
    %v1225 = vrsqrt.pop %v1208
    %v1226 = vmul.f32 %v1225, %v1208
    %v1227 = vmul.f32 %v1226, %v1225
    %v1228 = vmul.f32 0.5, %v1227
    %v1229 = vsub.f32 1.5, %v1228
    %v1230 = vmul.f32 %v1225, %v1229
    %vm1231 = vweird.f32 %v1208
    %vm1232 = vweird.f32 %v1225
    %vm1233 = vmor %vm1231, %vm1232
    %v1234 = vsel %vm1233, %v1225, %v1230
    %v1235 = vrsqrt.pop %v1209
    %v1236 = vmul.f32 %v1235, %v1209
    %v1237 = vmul.f32 %v1236, %v1235
    %v1238 = vmul.f32 0.5, %v1237
    %v1239 = vsub.f32 1.5, %v1238
    %v1240 = vmul.f32 %v1235, %v1239
    %vm1241 = vweird.f32 %v1209
    %vm1242 = vweird.f32 %v1235
    %vm1243 = vmor %vm1241, %vm1242
    %v1244 = vsel %vm1243, %v1235, %v1240
    %v1245 = vrsqrt.pop %v1210
    %v1246 = vmul.f32 %v1245, %v1210
    %v1247 = vmul.f32 %v1246, %v1245
    %v1248 = vmul.f32 0.5, %v1247
    %v1249 = vsub.f32 1.5, %v1248
    %v1250 = vmul.f32 %v1245, %v1249
    %vm1251 = vweird.f32 %v1210
    %vm1252 = vweird.f32 %v1245
    %vm1253 = vmor %vm1251, %vm1252
    %v1254 = vsel %vm1253, %v1245, %v1250
    %v1255 = vrsqrt.pop %v1211
    %v1256 = vmul.f32 %v1255, %v1211
    %v1257 = vmul.f32 %v1256, %v1255
    %v1258 = vmul.f32 0.5, %v1257
    %v1259 = vsub.f32 1.5, %v1258
    %v1260 = vmul.f32 %v1255, %v1259
    %vm1261 = vweird.f32 %v1211
    %vm1262 = vweird.f32 %v1255
    %vm1263 = vmor %vm1261, %vm1262
    %v1264 = vsel %vm1263, %v1255, %v1260
    %v1265 = vrsqrt.pop %v1212
    %v1266 = vmul.f32 %v1265, %v1212
    %v1267 = vmul.f32 %v1266, %v1265
    %v1268 = vmul.f32 0.5, %v1267
    %v1269 = vsub.f32 1.5, %v1268
    %v1270 = vmul.f32 %v1265, %v1269
    %vm1271 = vweird.f32 %v1212
    %vm1272 = vweird.f32 %v1265
    %vm1273 = vmor %vm1271, %vm1272
    %v1274 = vsel %vm1273, %v1265, %v1270
    %v1275 = vrsqrt.pop %v1213
    %v1276 = vmul.f32 %v1275, %v1213
    %v1277 = vmul.f32 %v1276, %v1275
    %v1278 = vmul.f32 0.5, %v1277
    %v1279 = vsub.f32 1.5, %v1278
    %v1280 = vmul.f32 %v1275, %v1279
    %vm1281 = vweird.f32 %v1213
    %vm1282 = vweird.f32 %v1275
    %vm1283 = vmor %vm1281, %vm1282
    %v1284 = vsel %vm1283, %v1275, %v1280
    %v1285 = vrsqrt.pop %v1214
    %v1286 = vmul.f32 %v1285, %v1214
    %v1287 = vmul.f32 %v1286, %v1285
    %v1288 = vmul.f32 0.5, %v1287
    %v1289 = vsub.f32 1.5, %v1288
    %v1290 = vmul.f32 %v1285, %v1289
    %vm1291 = vweird.f32 %v1214
    %vm1292 = vweird.f32 %v1285
    %vm1293 = vmor %vm1291, %vm1292
    %v1294 = vsel %vm1293, %v1285, %v1290
    %v1295 = vmul.f32 %v1199, %v1224
    %v1296 = vmul.f32 %v1200, %v1234
    %v1297 = vmul.f32 %v1201, %v1244
    %v1298 = vmul.f32 %v1202, %v1254
    %v1299 = vmul.f32 %v1203, %v1264
    %v1300 = vmul.f32 %v1204, %v1274
    %v1301 = vmul.f32 %v1205, %v1284
    %v1302 = vmul.f32 %v1206, %v1294
    %v1304 = vperm.slane %v1094, 0
    %v1306 = vmul.f32 %v1295, %v1304
    %v1307 = vmul.f32 %v1296, %v1304
    %v1308 = vmul.f32 %v1297, %v1304
    %v1309 = vmul.f32 %v1298, %v1304
    %v1310 = vmul.f32 %v1299, %v1304
    %v1311 = vmul.f32 %v1300, %v1304
    %v1312 = vmul.f32 %v1301, %v1304
    %v1313 = vmul.f32 %v1302, %v1304
    %v1315 = vperm.slane %v1095, 0
    %v1317 = vadd.f32 %v1306, %v1315
    %v1318 = vadd.f32 %v1307, %v1315
    %v1319 = vadd.f32 %v1308, %v1315
    %v1320 = vadd.f32 %v1309, %v1315
    %v1321 = vadd.f32 %v1310, %v1315
    %v1322 = vadd.f32 %v1311, %v1315
    %v1323 = vadd.f32 %v1312, %v1315
    %v1324 = vadd.f32 %v1313, %v1315
    %v1325 = vmax.f32 %v1317, 0.0
    %v1326 = vmax.f32 %v1318, 0.0
    %v1327 = vmax.f32 %v1319, 0.0
    %v1328 = vmax.f32 %v1320, 0.0
    %v1329 = vmax.f32 %v1321, 0.0
    %v1330 = vmax.f32 %v1322, 0.0
    %v1331 = vmax.f32 %v1323, 0.0
    %v1332 = vmax.f32 %v1324, 0.0
    %v1333 = vld [vmem:[%s14] sm:$0xf]
    %v1334 = vld [vmem:[%s14 + $0x4] sm:$0xf]
    %v1335 = vld [vmem:[%s14 + $0x8] sm:$0xf]
    %v1336 = vld [vmem:[%s14 + $0xc] sm:$0xf]
    %v1337 = vld [vmem:[#allocation19] sm:$0x1]
    %v1338 = vld [vmem:[#allocation20] sm:$0x1]
    %v1339 = vld [vmem:[#allocation22] sm:$0x1]
    %v1340 = vld [vmem:[%s18] sm:$0xf]
    %v1341 = vld [vmem:[%s18 + $0x4] sm:$0xf]
    %v1342 = vld [vmem:[%s19] sm:$0x1]
    %v1343 = vpack.c.bf16 %v1326, %v1325
    %v1344 = vpack.c.bf16 %v1328, %v1327
    %v1345 = vpack.c.bf16 %v1330, %v1329
    %v1346 = vpack.c.bf16 %v1332, %v1331
    %v1348 = vperm.slane %v1337, 0
    %v1354 = vunpack.c.l.b16 %v1333
    %v1355 = vunpack.c.l.b16 %v1334
    %v1356 = vunpack.c.l.b16 %v1335
    %v1357 = vunpack.c.l.b16 %v1336
    %v1358 = vpack.c.b16 %v1355, %v1354
    %v1359 = vpack.c.b16 %v1357, %v1356
    %v1363 = vsel %vm1040, %v1343, 0
    %v1366 = vsel %vm1040, %v1344, 0
    %v1369 = vsel %vm1040, %v1345, 0
    %v1372 = vsel %vm1040, %v1346, 0
    %1374 = vmatpush.bf16.msra.mxu0 0
    %1375 = vmatpush.bf16.msra.mxu0 0
    %1376 = vmatpush.bf16.msra.mxu0 0
    %1377 = vmatpush.bf16.msra.mxu0 0
    %1378 = vmatpush.bf16.msra.mxu0 0
    %1379 = vmatpush.bf16.msra.mxu0 0
    %1380 = vmatpush.bf16.msra.mxu0 %v1359
    %1381 = vmatpush.bf16.msra.mxu0 %v1358
    %1382 = vmatmul.bf16.gmra.mxu0 %v1363
    %v1383 = vpop.f32.mrf.mxu0
    %v1384 = vadd.f32 %v1348, %v1383
    %v1385 = vpop.f32.mrf.mxu0
    %v1386 = vadd.f32 %v1348, %v1385
    %1387 = vmatmul.bf16.gmra.mxu0 %v1366
    %v1388 = vpop.f32.mrf.mxu0
    %v1389 = vadd.f32 %v1348, %v1388
    %v1390 = vpop.f32.mrf.mxu0
    %v1391 = vadd.f32 %v1348, %v1390
    %1392 = vmatmul.bf16.gmra.mxu0 %v1369
    %v1393 = vpop.f32.mrf.mxu0
    %v1394 = vadd.f32 %v1348, %v1393
    %v1395 = vpop.f32.mrf.mxu0
    %v1396 = vadd.f32 %v1348, %v1395
    %1397 = vmatmul.bf16.gmra.mxu0 %v1372
    %v1398 = vpop.f32.mrf.mxu0
    %v1399 = vadd.f32 %v1348, %v1398
    %v1400 = vpop.f32.mrf.mxu0
    %v1401 = vadd.f32 %v1348, %v1400
    %1402 = vdwg.mxu0
    %v1403 = vsel %vm689, %v1384, 0.0
    %1404 = vadd.xlane.f32.xlu0 %v1403
    %v1405 = vpop.xlane.xlu0 %1404
    %v1406 = vsel %vm689, %v1386, 0.0
    %1407 = vadd.xlane.f32.xlu0 %v1406
    %v1408 = vpop.xlane.xlu0 %1407
    %v1409 = vsel %vm689, %v1389, 0.0
    %1410 = vadd.xlane.f32.xlu0 %v1409
    %v1411 = vpop.xlane.xlu0 %1410
    %v1412 = vsel %vm689, %v1391, 0.0
    %1413 = vadd.xlane.f32.xlu0 %v1412
    %v1414 = vpop.xlane.xlu0 %1413
    %v1415 = vsel %vm689, %v1394, 0.0
    %1416 = vadd.xlane.f32.xlu0 %v1415
    %v1417 = vpop.xlane.xlu0 %1416
    %v1418 = vsel %vm689, %v1396, 0.0
    %1419 = vadd.xlane.f32.xlu0 %v1418
    %v1420 = vpop.xlane.xlu0 %1419
    %v1421 = vsel %vm689, %v1399, 0.0
    %1422 = vadd.xlane.f32.xlu0 %v1421
    %v1423 = vpop.xlane.xlu0 %1422
    %v1424 = vsel %vm689, %v1401, 0.0
    %1425 = vadd.xlane.f32.xlu0 %v1424
    %v1426 = vpop.xlane.xlu0 %1425
    %v1427 = vmul.f32 %v1405, %v720
    %v1428 = vmul.f32 %v1408, %v720
    %v1429 = vmul.f32 %v1411, %v720
    %v1430 = vmul.f32 %v1414, %v720
    %v1431 = vmul.f32 %v1417, %v720
    %v1432 = vmul.f32 %v1420, %v720
    %v1433 = vmul.f32 %v1423, %v720
    %v1434 = vmul.f32 %v1426, %v720
    %v1435 = vmul.f32 %v1384, %v1384
    %v1436 = vmul.f32 %v1386, %v1386
    %v1437 = vmul.f32 %v1389, %v1389
    %v1438 = vmul.f32 %v1391, %v1391
    %v1439 = vmul.f32 %v1394, %v1394
    %v1440 = vmul.f32 %v1396, %v1396
    %v1441 = vmul.f32 %v1399, %v1399
    %v1442 = vmul.f32 %v1401, %v1401
    %v1443 = vsel %vm689, %v1435, 0.0
    %1444 = vadd.xlane.f32.xlu0 %v1443
    %v1445 = vpop.xlane.xlu0 %1444
    %v1446 = vsel %vm689, %v1436, 0.0
    %1447 = vadd.xlane.f32.xlu0 %v1446
    %v1448 = vpop.xlane.xlu0 %1447
    %v1449 = vsel %vm689, %v1437, 0.0
    %1450 = vadd.xlane.f32.xlu0 %v1449
    %v1451 = vpop.xlane.xlu0 %1450
    %v1452 = vsel %vm689, %v1438, 0.0
    %1453 = vadd.xlane.f32.xlu0 %v1452
    %v1454 = vpop.xlane.xlu0 %1453
    %v1455 = vsel %vm689, %v1439, 0.0
    %1456 = vadd.xlane.f32.xlu0 %v1455
    %v1457 = vpop.xlane.xlu0 %1456
    %v1458 = vsel %vm689, %v1440, 0.0
    %1459 = vadd.xlane.f32.xlu0 %v1458
    %v1460 = vpop.xlane.xlu0 %1459
    %v1461 = vsel %vm689, %v1441, 0.0
    %1462 = vadd.xlane.f32.xlu0 %v1461
    %v1463 = vpop.xlane.xlu0 %1462
    %v1464 = vsel %vm689, %v1442, 0.0
    %1465 = vadd.xlane.f32.xlu0 %v1464
    %v1466 = vpop.xlane.xlu0 %1465
    %v1467 = vmul.f32 %v1445, %v720
    %v1468 = vmul.f32 %v1448, %v720
    %v1469 = vmul.f32 %v1451, %v720
    %v1470 = vmul.f32 %v1454, %v720
    %v1471 = vmul.f32 %v1457, %v720
    %v1472 = vmul.f32 %v1460, %v720
    %v1473 = vmul.f32 %v1463, %v720
    %v1474 = vmul.f32 %v1466, %v720
    %v1475 = vmul.f32 %v1427, %v1427
    %v1476 = vmul.f32 %v1428, %v1428
    %v1477 = vmul.f32 %v1429, %v1429
    %v1478 = vmul.f32 %v1430, %v1430
    %v1479 = vmul.f32 %v1431, %v1431
    %v1480 = vmul.f32 %v1432, %v1432
    %v1481 = vmul.f32 %v1433, %v1433
    %v1482 = vmul.f32 %v1434, %v1434
    %v1483 = vsub.f32 %v1467, %v1475
    %v1484 = vsub.f32 %v1468, %v1476
    %v1485 = vsub.f32 %v1469, %v1477
    %v1486 = vsub.f32 %v1470, %v1478
    %v1487 = vsub.f32 %v1471, %v1479
    %v1488 = vsub.f32 %v1472, %v1480
    %v1489 = vsub.f32 %v1473, %v1481
    %v1490 = vsub.f32 %v1474, %v1482
    %v1491 = vmax.f32 %v1483, 0.0
    %v1492 = vmax.f32 %v1484, 0.0
    %v1493 = vmax.f32 %v1485, 0.0
    %v1494 = vmax.f32 %v1486, 0.0
    %v1495 = vmax.f32 %v1487, 0.0
    %v1496 = vmax.f32 %v1488, 0.0
    %v1497 = vmax.f32 %v1489, 0.0
    %v1498 = vmax.f32 %v1490, 0.0
    %v1499 = vsub.f32 %v1384, %v1427
    %v1500 = vsub.f32 %v1386, %v1428
    %v1501 = vsub.f32 %v1389, %v1429
    %v1502 = vsub.f32 %v1391, %v1430
    %v1503 = vsub.f32 %v1394, %v1431
    %v1504 = vsub.f32 %v1396, %v1432
    %v1505 = vsub.f32 %v1399, %v1433
    %v1506 = vsub.f32 %v1401, %v1434
    %v1507 = vadd.f32 %v1491, 1e-05
    %v1508 = vadd.f32 %v1492, 1e-05
    %v1509 = vadd.f32 %v1493, 1e-05
    %v1510 = vadd.f32 %v1494, 1e-05
    %v1511 = vadd.f32 %v1495, 1e-05
    %v1512 = vadd.f32 %v1496, 1e-05
    %v1513 = vadd.f32 %v1497, 1e-05
    %v1514 = vadd.f32 %v1498, 1e-05
    %v1515 = vrsqrt.pop %v1507
    %v1516 = vmul.f32 %v1515, %v1507
    %v1517 = vmul.f32 %v1516, %v1515
    %v1518 = vmul.f32 0.5, %v1517
    %v1519 = vsub.f32 1.5, %v1518
    %v1520 = vmul.f32 %v1515, %v1519
    %vm1521 = vweird.f32 %v1507
    %vm1522 = vweird.f32 %v1515
    %vm1523 = vmor %vm1521, %vm1522
    %v1524 = vsel %vm1523, %v1515, %v1520
    %v1525 = vrsqrt.pop %v1508
    %v1526 = vmul.f32 %v1525, %v1508
    %v1527 = vmul.f32 %v1526, %v1525
    %v1528 = vmul.f32 0.5, %v1527
    %v1529 = vsub.f32 1.5, %v1528
    %v1530 = vmul.f32 %v1525, %v1529
    %vm1531 = vweird.f32 %v1508
    %vm1532 = vweird.f32 %v1525
    %vm1533 = vmor %vm1531, %vm1532
    %v1534 = vsel %vm1533, %v1525, %v1530
    %v1535 = vrsqrt.pop %v1509
    %v1536 = vmul.f32 %v1535, %v1509
    %v1537 = vmul.f32 %v1536, %v1535
    %v1538 = vmul.f32 0.5, %v1537
    %v1539 = vsub.f32 1.5, %v1538
    %v1540 = vmul.f32 %v1535, %v1539
    %vm1541 = vweird.f32 %v1509
    %vm1542 = vweird.f32 %v1535
    %vm1543 = vmor %vm1541, %vm1542
    %v1544 = vsel %vm1543, %v1535, %v1540
    %v1545 = vrsqrt.pop %v1510
    %v1546 = vmul.f32 %v1545, %v1510
    %v1547 = vmul.f32 %v1546, %v1545
    %v1548 = vmul.f32 0.5, %v1547
    %v1549 = vsub.f32 1.5, %v1548
    %v1550 = vmul.f32 %v1545, %v1549
    %vm1551 = vweird.f32 %v1510
    %vm1552 = vweird.f32 %v1545
    %vm1553 = vmor %vm1551, %vm1552
    %v1554 = vsel %vm1553, %v1545, %v1550
    %v1555 = vrsqrt.pop %v1511
    %v1556 = vmul.f32 %v1555, %v1511
    %v1557 = vmul.f32 %v1556, %v1555
    %v1558 = vmul.f32 0.5, %v1557
    %v1559 = vsub.f32 1.5, %v1558
    %v1560 = vmul.f32 %v1555, %v1559
    %vm1561 = vweird.f32 %v1511
    %vm1562 = vweird.f32 %v1555
    %vm1563 = vmor %vm1561, %vm1562
    %v1564 = vsel %vm1563, %v1555, %v1560
    %v1565 = vrsqrt.pop %v1512
    %v1566 = vmul.f32 %v1565, %v1512
    %v1567 = vmul.f32 %v1566, %v1565
    %v1568 = vmul.f32 0.5, %v1567
    %v1569 = vsub.f32 1.5, %v1568
    %v1570 = vmul.f32 %v1565, %v1569
    %vm1571 = vweird.f32 %v1512
    %vm1572 = vweird.f32 %v1565
    %vm1573 = vmor %vm1571, %vm1572
    %v1574 = vsel %vm1573, %v1565, %v1570
    %v1575 = vrsqrt.pop %v1513
    %v1576 = vmul.f32 %v1575, %v1513
    %v1577 = vmul.f32 %v1576, %v1575
    %v1578 = vmul.f32 0.5, %v1577
    %v1579 = vsub.f32 1.5, %v1578
    %v1580 = vmul.f32 %v1575, %v1579
    %vm1581 = vweird.f32 %v1513
    %vm1582 = vweird.f32 %v1575
    %vm1583 = vmor %vm1581, %vm1582
    %v1584 = vsel %vm1583, %v1575, %v1580
    %v1585 = vrsqrt.pop %v1514
    %v1586 = vmul.f32 %v1585, %v1514
    %v1587 = vmul.f32 %v1586, %v1585
    %v1588 = vmul.f32 0.5, %v1587
    %v1589 = vsub.f32 1.5, %v1588
    %v1590 = vmul.f32 %v1585, %v1589
    %vm1591 = vweird.f32 %v1514
    %vm1592 = vweird.f32 %v1585
    %vm1593 = vmor %vm1591, %vm1592
    %v1594 = vsel %vm1593, %v1585, %v1590
    %v1595 = vmul.f32 %v1499, %v1524
    %v1596 = vmul.f32 %v1500, %v1534
    %v1597 = vmul.f32 %v1501, %v1544
    %v1598 = vmul.f32 %v1502, %v1554
    %v1599 = vmul.f32 %v1503, %v1564
    %v1600 = vmul.f32 %v1504, %v1574
    %v1601 = vmul.f32 %v1505, %v1584
    %v1602 = vmul.f32 %v1506, %v1594
    %v1604 = vperm.slane %v1338, 0
    %v1606 = vmul.f32 %v1595, %v1604
    %v1607 = vmul.f32 %v1596, %v1604
    %v1608 = vmul.f32 %v1597, %v1604
    %v1609 = vmul.f32 %v1598, %v1604
    %v1610 = vmul.f32 %v1599, %v1604
    %v1611 = vmul.f32 %v1600, %v1604
    %v1612 = vmul.f32 %v1601, %v1604
    %v1613 = vmul.f32 %v1602, %v1604
    %v1615 = vperm.slane %v1339, 0
    %v1617 = vadd.f32 %v1606, %v1615
    %v1618 = vadd.f32 %v1607, %v1615
    %v1619 = vadd.f32 %v1608, %v1615
    %v1620 = vadd.f32 %v1609, %v1615
    %v1621 = vadd.f32 %v1610, %v1615
    %v1622 = vadd.f32 %v1611, %v1615
    %v1623 = vadd.f32 %v1612, %v1615
    %v1624 = vadd.f32 %v1613, %v1615
    %v1625 = vmax.f32 %v1617, 0.0
    %v1626 = vmax.f32 %v1618, 0.0
    %v1627 = vmax.f32 %v1619, 0.0
    %v1628 = vmax.f32 %v1620, 0.0
    %v1629 = vmax.f32 %v1621, 0.0
    %v1630 = vmax.f32 %v1622, 0.0
    %v1631 = vmax.f32 %v1623, 0.0
    %v1632 = vmax.f32 %v1624, 0.0
    %v1633 = vpack.c.bf16 %v1626, %v1625
    %v1634 = vpack.c.bf16 %v1628, %v1627
    %v1635 = vpack.c.bf16 %v1630, %v1629
    %v1636 = vpack.c.bf16 %v1632, %v1631
    %v1638 = vperm.slane %v1342, 0
    %v1642 = vunpack.c.l.b16 %v1340
    %v1643 = vunpack.c.l.b16 %v1341
    %v1644 = vpack.c.b16 %v1643, %v1642
    %v1647 = vsel %vm689, %v1633, 0
    %v1650 = vsel %vm689, %v1634, 0
    %v1653 = vsel %vm689, %v1635, 0
    %v1656 = vsel %vm689, %v1636, 0
    %1658 = vmatpush.bf16.msra.mxu0 0
    %1659 = vmatpush.bf16.msra.mxu0 0
    %1660 = vmatpush.bf16.msra.mxu0 0
    %1661 = vmatpush.bf16.msra.mxu0 0
    %1662 = vmatpush.bf16.msra.mxu0 0
    %1663 = vmatpush.bf16.msra.mxu0 0
    %1664 = vmatpush.bf16.msra.mxu0 0
    %1665 = vmatpush.bf16.msra.mxu0 %v1644
    %1666 = vmatmul.bf16.gmra.mxu0 %v1647
    %v1667 = vpop.f32.mrf.mxu0
    %v1668 = vadd.f32 %v1638, %v1667
    %v1669 = vpop.f32.mrf.mxu0
    %v1670 = vadd.f32 %v1638, %v1669
    %1671 = vmatmul.bf16.gmra.mxu0 %v1650
    %v1672 = vpop.f32.mrf.mxu0
    %v1673 = vadd.f32 %v1638, %v1672
    %v1674 = vpop.f32.mrf.mxu0
    %v1675 = vadd.f32 %v1638, %v1674
    %1676 = vmatmul.bf16.gmra.mxu0 %v1653
    %v1677 = vpop.f32.mrf.mxu0
    %v1678 = vadd.f32 %v1638, %v1677
    %v1679 = vpop.f32.mrf.mxu0
    %v1680 = vadd.f32 %v1638, %v1679
    %1681 = vmatmul.bf16.gmra.mxu0 %v1656
    %v1682 = vpop.f32.mrf.mxu0
    %v1683 = vadd.f32 %v1638, %v1682
    %v1684 = vpop.f32.mrf.mxu0
    %v1685 = vadd.f32 %v1638, %v1684
    %1686 = vdwg.mxu0
    %1687 = vmax.xlane.f32.xlu0 %v1668
    %v1688 = vpop.xlane.xlu0 %1687
    %1689 = vmax.xlane.f32.xlu0 %v1670
    %v1690 = vpop.xlane.xlu0 %1689
    %1691 = vmax.xlane.f32.xlu0 %v1673
    %v1692 = vpop.xlane.xlu0 %1691
    %1693 = vmax.xlane.f32.xlu0 %v1675
    %v1694 = vpop.xlane.xlu0 %1693
    %1695 = vmax.xlane.f32.xlu0 %v1678
    %v1696 = vpop.xlane.xlu0 %1695
    %1697 = vmax.xlane.f32.xlu0 %v1680
    %v1698 = vpop.xlane.xlu0 %1697
    %1699 = vmax.xlane.f32.xlu0 %v1683
    %v1700 = vpop.xlane.xlu0 %1699
    %1701 = vmax.xlane.f32.xlu0 %v1685
    %v1702 = vpop.xlane.xlu0 %1701
    %v1703 = vsub.f32 %v1668, %v1688
    %v1704 = vsub.f32 %v1670, %v1690
    %v1705 = vsub.f32 %v1673, %v1692
    %v1706 = vsub.f32 %v1675, %v1694
    %v1707 = vsub.f32 %v1678, %v1696
    %v1708 = vsub.f32 %v1680, %v1698
    %v1709 = vsub.f32 %v1683, %v1700
    %v1710 = vsub.f32 %v1685, %v1702
    %v1711 = vmul.f32 %v1703, 1.442695
    %v1712 = vpow.pop %v1711
    %v1713 = vmul.f32 %v1704, 1.442695
    %v1714 = vpow.pop %v1713
    %v1715 = vmul.f32 %v1705, 1.442695
    %v1716 = vpow.pop %v1715
    %v1717 = vmul.f32 %v1706, 1.442695
    %v1718 = vpow.pop %v1717
    %v1719 = vmul.f32 %v1707, 1.442695
    %v1720 = vpow.pop %v1719
    %v1721 = vmul.f32 %v1708, 1.442695
    %v1722 = vpow.pop %v1721
    %v1723 = vmul.f32 %v1709, 1.442695
    %v1724 = vpow.pop %v1723
    %v1725 = vmul.f32 %v1710, 1.442695
    %v1726 = vpow.pop %v1725
    %1727 = vadd.xlane.f32.xlu0 %v1712
    %v1728 = vpop.xlane.xlu0 %1727
    %1729 = vadd.xlane.f32.xlu0 %v1714
    %v1730 = vpop.xlane.xlu0 %1729
    %1731 = vadd.xlane.f32.xlu0 %v1716
    %v1732 = vpop.xlane.xlu0 %1731
    %1733 = vadd.xlane.f32.xlu0 %v1718
    %v1734 = vpop.xlane.xlu0 %1733
    %1735 = vadd.xlane.f32.xlu0 %v1720
    %v1736 = vpop.xlane.xlu0 %1735
    %1737 = vadd.xlane.f32.xlu0 %v1722
    %v1738 = vpop.xlane.xlu0 %1737
    %1739 = vadd.xlane.f32.xlu0 %v1724
    %v1740 = vpop.xlane.xlu0 %1739
    %1741 = vadd.xlane.f32.xlu0 %v1726
    %v1742 = vpop.xlane.xlu0 %1741
    %v1743 = vlog2.pop %v1728
    %v1744 = vmul.f32 %v1743, 0.6931472
    %v1745 = vlog2.pop %v1730
    %v1746 = vmul.f32 %v1745, 0.6931472
    %v1747 = vlog2.pop %v1732
    %v1748 = vmul.f32 %v1747, 0.6931472
    %v1749 = vlog2.pop %v1734
    %v1750 = vmul.f32 %v1749, 0.6931472
    %v1751 = vlog2.pop %v1736
    %v1752 = vmul.f32 %v1751, 0.6931472
    %v1753 = vlog2.pop %v1738
    %v1754 = vmul.f32 %v1753, 0.6931472
    %v1755 = vlog2.pop %v1740
    %v1756 = vmul.f32 %v1755, 0.6931472
    %v1757 = vlog2.pop %v1742
    %v1758 = vmul.f32 %v1757, 0.6931472
    %v1759 = vsub.f32 %v1703, %v1744
    %v1760 = vsub.f32 %v1704, %v1746
    %v1761 = vsub.f32 %v1705, %v1748
    %v1762 = vsub.f32 %v1706, %v1750
    %v1763 = vsub.f32 %v1707, %v1752
    %v1764 = vsub.f32 %v1708, %v1754
    %v1765 = vsub.f32 %v1709, %v1756
    %v1766 = vsub.f32 %v1710, %v1758
    %1767 = vst [vmem:[#allocation23] sm:$0xff] %v1759
    %1768 = vst [vmem:[#allocation23 + $0x8] sm:$0xff] %v1760
    %1769 = vst [vmem:[#allocation23 + $0x10] sm:$0xff] %v1761
    %1770 = vst [vmem:[#allocation23 + $0x18] sm:$0xff] %v1762
    %1771 = vst [vmem:[#allocation23 + $0x20] sm:$0xff] %v1763
    %1772 = vst [vmem:[#allocation23 + $0x28] sm:$0xff] %v1764
    %1773 = vst [vmem:[#allocation23 + $0x30] sm:$0xff] %v1765
    %1774 = vst [vmem:[#allocation23 + $0x38] sm:$0xff] %v1766
    // Predicated region
    $region134: #{tpu_custom_call.1} parent=1 // pred_check
      _
    $region135: #{tpu_custom_call.1} parent=1 // pred_check_branch
      %1776 = sbr.rel (0) target = $region137
    $region136: #{tpu_custom_call.1} parent=1 // pred_region
      %1778 = vsyncadd [#allocation4], 0
      %s1779 = sshll.u32 [#allocation23], 4
      %s1780 = int_to_ptr.vmem [resolvable:$true] %s1779
      %s1781 = sshll.u32 %s20, 4
      %s1782 = int_to_ptr.hbm [resolvable:$true] %s1781
      %1787 = dma.vmem_to_hbm [thread:$0]  %s1780, 1024, %s1782, [#allocation4], 128, 128, 8
    $region137: #{tpu_custom_call.1} parent=1 // pred_fallthru
      _
    // Predicated region
    $region138: #{tpu_custom_call.1} parent=1 // pred_check
      _
    $region139: #{tpu_custom_call.1} parent=1 // pred_check_branch
      %1789 = sbr.rel (0) target = $region141
    $region140: #{tpu_custom_call.1} parent=1 // pred_region
      %1791 = dma.done [#allocation4], 1024
    $region141: #{tpu_custom_call.1} parent=1 // pred_fallthru
      _
    %1792 = vsyncpa [#allocation3], 1
    %1793 = vsyncpa [#allocation6], 1
    %1794 = vsyncpa [#allocation9], 1
    %1795 = vsyncpa [#allocation12], 1
    %1796 = vsyncpa [#allocation15], 1
    %1797 = vsyncpa [#allocation18], 1
    %1798 = vsyncpa [#allocation21], 1
    %1799 = vsyncpa [#allocation4], 1

</llo_original>
